<compile_context>
chip_gen: v5e
topology: v5e:2x2
jax: 0.10.0
libtpu: 0.0.40
codegen_flags: <defaults>
</compile_context>

<pallas_src>
import jax
import jax.numpy as jnp
from jax.experimental import pallas as pl
from jax.experimental.pallas import tpu as pltpu

# Natural and lane-padded layer sizes.
D_IN = 28 * 28          # 784
H1, H1P = 300, 384      # pad to multiple of 128
H2, H2P = 100, 128
D_OUT, D_OUTP = 10, 128


def _round_up(n, m):
    return ((n + m - 1) // m) * m


def lenet_kernel(x_ref, w1_ref, b1_ref, w2_ref, b2_ref, w3_ref, b3_ref, o_ref):
    """Fused fc1->relu->fc2->relu->fc3->log_softmax for one batch tile."""
    # In-kernel bf16 cast (wrapper passes f32; avoids a standalone XLA cast
    # pass over HBM).  MXU accumulates in f32.
    x = x_ref[...].astype(jnp.bfloat16)                                  # (TB, 784)

    # fc1 + ReLU.
    h1 = jnp.dot(x, w1_ref[...], preferred_element_type=jnp.float32)    # (TB, 384)
    h1 = jnp.maximum(h1 + b1_ref[...], 0.0)

    # fc2 + ReLU.
    h2 = jnp.dot(h1.astype(jnp.bfloat16), w2_ref[...],
                 preferred_element_type=jnp.float32)                    # (TB, 128)
    h2 = jnp.maximum(h2 + b2_ref[...], 0.0)

    # fc3.  b3's padded lanes (cols >= 10) hold -1e30, so padded logits are
    # already "masked" (padded W3 columns are zero) — no iota/where needed.
    logits = jnp.dot(h2.astype(jnp.bfloat16), w3_ref[...],
                     preferred_element_type=jnp.float32)                # (TB, 128)
    logits = logits + b3_ref[...]

    # Numerically stable log_softmax along dim=1 (f32); padded lanes
    # contribute exp(-1e30 - m) == 0 to the sum.
    m = jnp.max(logits, axis=-1, keepdims=True)
    shifted = logits - m
    lse = jnp.log(jnp.sum(jnp.exp(shifted), axis=-1, keepdims=True))
    o_ref[...] = (shifted - lse).astype(o_ref.dtype)                    # (TB, 128)


def lenet_300_100_forward(x, params, *, block_b=512):
    """x: (B, 1, 28, 28) or (B, 784) float32. params: prepared (padded) params.

    Returns (B, 10) float32 log-probabilities."""
    w1, b1, w2, b2, w3, b3 = params
    x0 = x.reshape(-1, D_IN).astype(jnp.float32)   # bf16 cast happens in-kernel
    B = x0.shape[0]

    # Pad only up to the 8-row sublane granularity (<= 7 extra rows).  The
    # grid handles a ragged final tile, so no full-tile HBM pad pass.
    B_pad = _round_up(B, 8)
    if B_pad != B:
        x0 = jnp.pad(x0, ((0, B_pad - B), (0, 0)))

    # Batch tile: large by default to amortize per-grid-step overhead; shrink
    # for small batches; split a single-tile batch into two tiles so the
    # "parallel" axis can use both v7x TensorCores.
    tile_b = min(block_b, B_pad)
    if pl.cdiv(B_pad, tile_b) == 1 and B_pad >= 16:
        tile_b = _round_up(B_pad // 2, 8)
    num_tiles = pl.cdiv(B_pad, tile_b)

    weight_bytes = 2 * (D_IN * H1P + H1P * H2P + H2P * D_OUTP)
    cost = pl.CostEstimate(
        flops=2 * B_pad * (D_IN * H1P + H1P * H2P + H2P * D_OUTP),
        transcendentals=B_pad * D_OUTP,
        bytes_accessed=B_pad * D_IN * 4 + weight_bytes + B_pad * D_OUTP * 4,
    )

    out_padded = pl.pallas_call(
        lenet_kernel,
        out_shape=jax.ShapeDtypeStruct((B_pad, D_OUTP), jnp.float32),
        grid=(num_tiles,),
        in_specs=[
            pl.BlockSpec((tile_b, D_IN), lambda i: (i, 0)),   # x: tiled over batch
            pl.BlockSpec((D_IN, H1P), lambda i: (0, 0)),      # W1 (VMEM-resident)
            pl.BlockSpec((1, H1P), lambda i: (0, 0)),         # b1
            pl.BlockSpec((H1P, H2P), lambda i: (0, 0)),       # W2
            pl.BlockSpec((1, H2P), lambda i: (0, 0)),         # b2
            pl.BlockSpec((H2P, D_OUTP), lambda i: (0, 0)),    # W3
            pl.BlockSpec((1, D_OUTP), lambda i: (0, 0)),      # b3 (padded lanes = -1e30)
        ],
        out_specs=pl.BlockSpec((tile_b, D_OUTP), lambda i: (i, 0)),
        compiler_params=pltpu.CompilerParams(
            dimension_semantics=("parallel",),
            vmem_limit_bytes=32 * 1024 * 1024,
        ),
        cost_estimate=cost,
    )(x0, w1, b1, w2, b2, w3, b3)

    return out_padded[:B, :D_OUT]


def init_params(key):
    """Natural-shape f32 params matching nn.Linear default init.

    Weights stored as (in_features, out_features); biases as (out,)."""
    dims = [(D_IN, H1), (H1, H2), (H2, D_OUT)]
    params = []
    keys = jax.random.split(key, 2 * len(dims))
    for i, (fan_in, fan_out) in enumerate(dims):
        bound = 1.0 / (fan_in ** 0.5)
        w = jax.random.uniform(keys[2 * i], (fan_in, fan_out),
                               minval=-bound, maxval=bound, dtype=jnp.float32)
        b = jax.random.uniform(keys[2 * i + 1], (fan_out,),
                               minval=-bound, maxval=bound, dtype=jnp.float32)
        params += [w, b]
    return tuple(params)


def prepare_params(raw_params):
    """Zero-pad feature dims to lane multiples and cast weights to bf16.

    Padded W entries are zero, so they never contribute to valid outputs.
    b3's padded lanes are set to -1e30, which masks the padded logits for the
    log_softmax without any in-kernel select."""
    w1, b1, w2, b2, w3, b3 = raw_params

    def pad_w(w, rows, cols, dtype):
        out = jnp.zeros((rows, cols), dtype=jnp.float32)
        out = out.at[: w.shape[0], : w.shape[1]].set(w)
        return out.astype(dtype)

    def pad_b(b, cols, pad_value=0.0):
        out = jnp.full((1, cols), pad_value, dtype=jnp.float32)
        return out.at[0, : b.shape[0]].set(b.astype(jnp.float32))

    return (
        pad_w(w1, D_IN, H1P, jnp.bfloat16), pad_b(b1, H1P),
        pad_w(w2, H1P, H2P, jnp.bfloat16), pad_b(b2, H2P),
        pad_w(w3, H2P, D_OUTP, jnp.bfloat16), pad_b(b3, D_OUTP, pad_value=-1e30),
    )


def reference_forward(x, raw_params):
    """Pure-JAX f32 reference (same math as the PyTorch module)."""
    w1, b1, w2, b2, w3, b3 = raw_params
    x0 = x.reshape(-1, D_IN).astype(jnp.float32)
    h1 = jnp.maximum(x0 @ w1 + b1, 0.0)
    h2 = jnp.maximum(h1 @ w2 + b2, 0.0)
    logits = h2 @ w3 + b3
    return jax.nn.log_softmax(logits, axis=-1)


if __name__ == "__main__":
    key = jax.random.PRNGKey(0)
    pkey, xkey = jax.random.split(key)

    raw_params = init_params(pkey)
    params = prepare_params(raw_params)

    # Small batch, MNIST-shaped input (NCHW) consistent with the module.
    x = jax.random.normal(xkey, (2, 1, 28, 28), dtype=jnp.float32)

    out = lenet_300_100_forward(x, params)
    jax.block_until_ready(out)

    assert out.shape == (2, D_OUT)

    # Each row of log-probs should exp-sum to (approximately) 1.
    row_sums = jnp.exp(out).sum(axis=1)
    assert bool(jnp.all(jnp.abs(row_sums - 1.0) < 1e-3)), row_sums

    # Match the f32 reference (tolerance covers bf16 matmul operands).
    ref = reference_forward(x, raw_params)
    assert bool(jnp.max(jnp.abs(out - ref)) < 0.1), jnp.max(jnp.abs(out - ref))

    print("KERNEL_OK")
</pallas_src>

<mosaic_0001>
module attributes {stable_mosaic.version = 11 : i64} {
  func.func @lenet_kernel(%arg0: i32, %arg1: memref<8x784xf32, #tpu.memory_space<vmem>>, %arg2: memref<784x384xbf16, #tpu.memory_space<vmem>>, %arg3: memref<1x384xf32, #tpu.memory_space<vmem>>, %arg4: memref<384x128xbf16, #tpu.memory_space<vmem>>, %arg5: memref<1x128xf32, #tpu.memory_space<vmem>>, %arg6: memref<128x128xbf16, #tpu.memory_space<vmem>>, %arg7: memref<1x128xf32, #tpu.memory_space<vmem>>, %arg8: memref<8x128xf32, #tpu.memory_space<vmem>>) attributes {dimension_semantics = [#tpu.dimension_semantics<parallel>], iteration_bounds = array<i64: 1>, scalar_prefetch = 0 : i64, scratch_operands = 0 : i64, tpu.core_type = #tpu.core_type<tc>, window_params = [{transform_indices = @transform_0, window_bounds = array<i64: 8, 784>}, {pipeline_mode = #tpu.pipeline_mode<synchronous>, transform_indices = @transform_1, window_bounds = array<i64: 784, 384>}, {pipeline_mode = #tpu.pipeline_mode<synchronous>, transform_indices = @transform_2, window_bounds = array<i64: 1, 384>}, {pipeline_mode = #tpu.pipeline_mode<synchronous>, transform_indices = @transform_3, window_bounds = array<i64: 384, 128>}, {pipeline_mode = #tpu.pipeline_mode<synchronous>, transform_indices = @transform_4, window_bounds = array<i64: 1, 128>}, {pipeline_mode = #tpu.pipeline_mode<synchronous>, transform_indices = @transform_5, window_bounds = array<i64: 128, 128>}, {pipeline_mode = #tpu.pipeline_mode<synchronous>, transform_indices = @transform_6, window_bounds = array<i64: 1, 128>}, {transform_indices = @transform_7, window_bounds = array<i64: 8, 128>}]} {
    %c0 = arith.constant 0 : index
    %c0_0 = arith.constant 0 : index
    %0 = vector.load %arg1[%c0, %c0_0] : memref<8x784xf32, #tpu.memory_space<vmem>>, vector<8x784xf32>
    %1 = arith.truncf %0 : vector<8x784xf32> to vector<8x784xbf16>
    %c0_1 = arith.constant 0 : index
    %c0_2 = arith.constant 0 : index
    %2 = vector.load %arg2[%c0_1, %c0_2] : memref<784x384xbf16, #tpu.memory_space<vmem>>, vector<784x384xbf16>
    %cst = arith.constant dense<0.000000e+00> : vector<8x384xf32>
    %3 = tpu.matmul %1, %2, %cst {dimension_numbers = #tpu.dot_dimension_numbers<[1], [0], [0], [1], [0, 0, 1, 1], [], []>} : vector<8x784xbf16>, vector<784x384xbf16>, vector<8x384xf32> -> vector<8x384xf32>
    %c0_3 = arith.constant 0 : index
    %c0_4 = arith.constant 0 : index
    %4 = vector.load %arg3[%c0_3, %c0_4] : memref<1x384xf32, #tpu.memory_space<vmem>>, vector<1x384xf32>
    %5 = vector.broadcast %4 : vector<1x384xf32> to vector<8x384xf32>
    %6 = arith.addf %3, %5 : vector<8x384xf32>
    %cst_5 = arith.constant 0.000000e+00 : f32
    %7 = vector.broadcast %cst_5 : f32 to vector<8x384xf32>
    %8 = arith.maximumf %6, %7 : vector<8x384xf32>
    %9 = arith.truncf %8 : vector<8x384xf32> to vector<8x384xbf16>
    %c0_6 = arith.constant 0 : index
    %c0_7 = arith.constant 0 : index
    %10 = vector.load %arg4[%c0_6, %c0_7] : memref<384x128xbf16, #tpu.memory_space<vmem>>, vector<384x128xbf16>
    %cst_8 = arith.constant dense<0.000000e+00> : vector<8x128xf32>
    %11 = tpu.matmul %9, %10, %cst_8 {dimension_numbers = #tpu.dot_dimension_numbers<[1], [0], [0], [1], [0, 0, 1, 1], [], []>} : vector<8x384xbf16>, vector<384x128xbf16>, vector<8x128xf32> -> vector<8x128xf32>
    %c0_9 = arith.constant 0 : index
    %c0_10 = arith.constant 0 : index
    %12 = vector.load %arg5[%c0_9, %c0_10] : memref<1x128xf32, #tpu.memory_space<vmem>>, vector<1x128xf32>
    %13 = vector.broadcast %12 : vector<1x128xf32> to vector<8x128xf32>
    %14 = arith.addf %11, %13 : vector<8x128xf32>
    %cst_11 = arith.constant 0.000000e+00 : f32
    %15 = vector.broadcast %cst_11 : f32 to vector<8x128xf32>
    %16 = arith.maximumf %14, %15 : vector<8x128xf32>
    %17 = arith.truncf %16 : vector<8x128xf32> to vector<8x128xbf16>
    %c0_12 = arith.constant 0 : index
    %c0_13 = arith.constant 0 : index
    %18 = vector.load %arg6[%c0_12, %c0_13] : memref<128x128xbf16, #tpu.memory_space<vmem>>, vector<128x128xbf16>
    %cst_14 = arith.constant dense<0.000000e+00> : vector<8x128xf32>
    %19 = tpu.matmul %17, %18, %cst_14 {dimension_numbers = #tpu.dot_dimension_numbers<[1], [0], [0], [1], [0, 0, 1, 1], [], []>} : vector<8x128xbf16>, vector<128x128xbf16>, vector<8x128xf32> -> vector<8x128xf32>
    %c0_15 = arith.constant 0 : index
    %c0_16 = arith.constant 0 : index
    %20 = vector.load %arg7[%c0_15, %c0_16] : memref<1x128xf32, #tpu.memory_space<vmem>>, vector<1x128xf32>
    %21 = vector.broadcast %20 : vector<1x128xf32> to vector<8x128xf32>
    %22 = arith.addf %19, %21 : vector<8x128xf32>
    %cst_17 = arith.constant dense<0xFF800000> : vector<8xf32>
    %23 = vector.multi_reduction <maximumf>, %22, %cst_17 [1] : vector<8x128xf32> to vector<8xf32>
    %24 = vector.shape_cast %23 : vector<8xf32> to vector<8x1xf32>
    %25 = vector.broadcast %24 : vector<8x1xf32> to vector<8x128xf32>
    %26 = arith.subf %22, %25 : vector<8x128xf32>
    %27 = math.exp %26 : vector<8x128xf32>
    %cst_18 = arith.constant dense<0.000000e+00> : vector<8xf32>
    %28 = vector.multi_reduction <add>, %27, %cst_18 [1] : vector<8x128xf32> to vector<8xf32>
    %29 = vector.shape_cast %28 : vector<8xf32> to vector<8x1xf32>
    %30 = math.log %29 : vector<8x1xf32>
    %31 = vector.broadcast %30 : vector<8x1xf32> to vector<8x128xf32>
    %32 = arith.subf %26, %31 : vector<8x128xf32>
    %c0_19 = arith.constant 0 : index
    %c0_20 = arith.constant 0 : index
    %33 = vector.load %arg8[%c0_19, %c0_20] : memref<8x128xf32, #tpu.memory_space<vmem>>, vector<8x128xf32>
    tpu.vector_store %arg8[%c0_19, %c0_20], %32 {strides = array<i32>} : memref<8x128xf32, #tpu.memory_space<vmem>>, vector<8x128xf32>,
    return
  }
  func.func @transform_0(%arg0: i32) -> (i32, i32) {
    %c0_i32 = arith.constant 0 : i32
    %c0_i32_0 = arith.constant 0 : i32
    return %arg0, %c0_i32 : i32, i32
  }
  func.func @transform_1(%arg0: i32) -> (i32, i32) {
    %c0_i32 = arith.constant 0 : i32
    %c0_i32_0 = arith.constant 0 : i32
    %c0_i32_1 = arith.constant 0 : i32
    return %c0_i32, %c0_i32_0 : i32, i32
  }
  func.func @transform_2(%arg0: i32) -> (i32, i32) {
    %c0_i32 = arith.constant 0 : i32
    %c0_i32_0 = arith.constant 0 : i32
    %c0_i32_1 = arith.constant 0 : i32
    return %c0_i32, %c0_i32_0 : i32, i32
  }
  func.func @transform_3(%arg0: i32) -> (i32, i32) {
    %c0_i32 = arith.constant 0 : i32
    %c0_i32_0 = arith.constant 0 : i32
    %c0_i32_1 = arith.constant 0 : i32
    return %c0_i32, %c0_i32_0 : i32, i32
  }
  func.func @transform_4(%arg0: i32) -> (i32, i32) {
    %c0_i32 = arith.constant 0 : i32
    %c0_i32_0 = arith.constant 0 : i32
    %c0_i32_1 = arith.constant 0 : i32
    return %c0_i32, %c0_i32_0 : i32, i32
  }
  func.func @transform_5(%arg0: i32) -> (i32, i32) {
    %c0_i32 = arith.constant 0 : i32
    %c0_i32_0 = arith.constant 0 : i32
    %c0_i32_1 = arith.constant 0 : i32
    return %c0_i32, %c0_i32_0 : i32, i32
  }
  func.func @transform_6(%arg0: i32) -> (i32, i32) {
    %c0_i32 = arith.constant 0 : i32
    %c0_i32_0 = arith.constant 0 : i32
    %c0_i32_1 = arith.constant 0 : i32
    return %c0_i32, %c0_i32_0 : i32, i32
  }
  func.func @transform_7(%arg0: i32) -> (i32, i32) {
    %c0_i32 = arith.constant 0 : i32
    %c0_i32_0 = arith.constant 0 : i32
    return %arg0, %c0_i32 : i32, i32
  }
}

</mosaic_0001>

<llo_original>
// kernel: tpu_custom_call.1
$region0: #{tpu_custom_call.1}
  #allocation0 [shape = 'u32[]', space=smem, size = 0x4, offset = 0x4, fixed_abs, tag = 'smem constant byte address 0x4 - core index']
  #allocation1 [shape = 'u32[72,128]{1,0:T(1,128)}', space=vmem, size = 0x9000, scoped, tag = 'internal scratch']
  %s0 = inlined_call_operand.hbm [shape: f32[8,784], index: 0, kind: input, shape index: {}]
  %s1 = inlined_call_operand.hbm [shape: bf16[784,384], index: 1, kind: input, shape index: {}]
  %s2 = inlined_call_operand.hbm [shape: f32[1,384], index: 2, kind: input, shape index: {}]
  %s3 = inlined_call_operand.hbm [shape: bf16[384,128], index: 3, kind: input, shape index: {}]
  %s4 = inlined_call_operand.vmem [shape: f32[1,128], index: 4, kind: input, shape index: {}]
  %s5 = inlined_call_operand.hbm [shape: bf16[128,128], index: 5, kind: input, shape index: {}]
  %s6 = inlined_call_operand.vmem [shape: f32[1,128], index: 6, kind: input, shape index: {}]
  %s7 = inlined_call_operand.hbm [shape: f32[8,128], index: 7, kind: output, shape index: {}]
  %s8 = sld [smem:[#allocation0]]
  $region58: #{tpu_custom_call.1} parent=0
    _
  %s10 = ssub.s32 1, %s8
  %s11 = scalar_select 0, %s10, %s8
  $region1: #{tpu_custom_call.1} parent=0
    #allocation2 [shape = 'u8[28672]{0}', space=vmem, size = 0x7000, scoped, tag = 'input window, operand 0, single buffered']
    #allocation3 [shape = 's32[1]{0}', space=sflag, size = 0x4, scoped, tag = 'scoped memory for tpu_custom_call.1']
    #allocation4 [shape = 's32[1]{0}', space=sflag, size = 0x4, scoped, tag = 'scoped memory for tpu_custom_call.1']
    #allocation5 [shape = 'u8[602112]{0}', space=vmem, size = 0x93000, scoped, tag = 'input window, operand 1, single buffered']
    #allocation6 [shape = 's32[1]{0}', space=sflag, size = 0x4, scoped, tag = 'scoped memory for tpu_custom_call.1']
    #allocation7 [shape = 'u8[1536]{0}', space=vmem, size = 0x800, scoped, tag = 'input window, operand 2, single buffered']
    #allocation8 [shape = 'u8[98304]{0}', space=vmem, size = 0x18000, scoped, tag = 'input window, operand 3, single buffered']
    #allocation9 [shape = 's32[1]{0}', space=sflag, size = 0x4, scoped, tag = 'scoped memory for tpu_custom_call.1']
    #allocation10 [shape = 'u8[32768]{0}', space=vmem, size = 0x8000, scoped, tag = 'input window, operand 5, single buffered']
    #allocation11 [shape = 'u8[4096]{0}', space=vmem, size = 0x1000, scoped, tag = 'output window, operand 0, single buffered']
    %12 = vsyncpa [#allocation3], 0
    %13 = vsyncpa [#allocation6], 0
    %14 = vsyncpa [#allocation9], 0
    %15 = vsyncpa [#allocation4], 0
    // Predicated region
    $region2: #{tpu_custom_call.1} parent=1 // pred_check
      _
    $region3: #{tpu_custom_call.1} parent=1 // pred_check_branch
      %17 = sbr.rel (0) target = $region5
    $region4: #{tpu_custom_call.1} parent=1 // pred_region
      %19 = vsyncadd [#allocation3], 0
      %s21 = sshll.u32 %s0, 4
      %s22 = int_to_ptr.hbm [resolvable:$true] %s21
      %s23 = sshll.u32 [#allocation2], 4
      %s24 = int_to_ptr.vmem [resolvable:$true] %s23
      %26 = dma.hbm_to_vmem [thread:$0]  %s22, 896, %s24, [#allocation3]
    $region5: #{tpu_custom_call.1} parent=1 // pred_fallthru
      _
    // Predicated region
    $region6: #{tpu_custom_call.1} parent=1 // pred_check
      _
    $region7: #{tpu_custom_call.1} parent=1 // pred_check_branch
      %28 = sbr.rel (0) target = $region9
    $region8: #{tpu_custom_call.1} parent=1 // pred_region
      %30 = vsyncadd [#allocation6], 0
      %s31 = sshll.u32 %s1, 4
      %s32 = int_to_ptr.hbm [resolvable:$true] %s31
      %s33 = sshll.u32 [#allocation5], 4
      %s34 = int_to_ptr.vmem [resolvable:$true] %s33
      %39 = dma.hbm_to_vmem [thread:$0]  %s32, 18816, %s34, [#allocation6], 192, 192, 12
    $region9: #{tpu_custom_call.1} parent=1 // pred_fallthru
      _
    // Predicated region
    $region10: #{tpu_custom_call.1} parent=1 // pred_check
      _
    $region11: #{tpu_custom_call.1} parent=1 // pred_check_branch
      %41 = sbr.rel (0) target = $region13
    $region12: #{tpu_custom_call.1} parent=1 // pred_region
      %43 = vsyncadd [#allocation6], 0
      %s45 = sshll.u32 %s2, 4
      %s46 = int_to_ptr.hbm [resolvable:$true] %s45
      %s47 = sshll.u32 [#allocation7], 4
      %s48 = int_to_ptr.vmem [resolvable:$true] %s47
      %50 = dma.hbm_to_vmem [thread:$0]  %s46, 48, %s48, [#allocation6]
    $region13: #{tpu_custom_call.1} parent=1 // pred_fallthru
      _
    // Predicated region
    $region14: #{tpu_custom_call.1} parent=1 // pred_check
      _
    $region15: #{tpu_custom_call.1} parent=1 // pred_check_branch
      %52 = sbr.rel (0) target = $region17
    $region16: #{tpu_custom_call.1} parent=1 // pred_region
      %54 = vsyncadd [#allocation9], 0
      %s55 = sshll.u32 %s3, 4
      %s56 = int_to_ptr.hbm [resolvable:$true] %s55
      %s57 = sshll.u32 [#allocation8], 4
      %s58 = int_to_ptr.vmem [resolvable:$true] %s57
      %63 = dma.hbm_to_vmem [thread:$0]  %s56, 3072, %s58, [#allocation9], 64, 64, 4
    $region17: #{tpu_custom_call.1} parent=1 // pred_fallthru
      _
    // Predicated region
    $region18: #{tpu_custom_call.1} parent=1 // pred_check
      _
    $region19: #{tpu_custom_call.1} parent=1 // pred_check_branch
      %65 = sbr.rel (0) target = $region21
    $region20: #{tpu_custom_call.1} parent=1 // pred_region
      _
    $region21: #{tpu_custom_call.1} parent=1 // pred_fallthru
      _
    // Predicated region
    $region22: #{tpu_custom_call.1} parent=1 // pred_check
      _
    $region23: #{tpu_custom_call.1} parent=1 // pred_check_branch
      %67 = sbr.rel (0) target = $region25
    $region24: #{tpu_custom_call.1} parent=1 // pred_region
      %69 = vsyncadd [#allocation9], 0
      %s70 = sshll.u32 %s5, 4
      %s71 = int_to_ptr.hbm [resolvable:$true] %s70
      %s72 = sshll.u32 [#allocation10], 4
      %s73 = int_to_ptr.vmem [resolvable:$true] %s72
      %78 = dma.hbm_to_vmem [thread:$0]  %s71, 1024, %s73, [#allocation9], 64, 64, 4
    $region25: #{tpu_custom_call.1} parent=1 // pred_fallthru
      _
    // Predicated region
    $region26: #{tpu_custom_call.1} parent=1 // pred_check
      _
    $region27: #{tpu_custom_call.1} parent=1 // pred_check_branch
      %80 = sbr.rel (0) target = $region29
    $region28: #{tpu_custom_call.1} parent=1 // pred_region
      _
    $region29: #{tpu_custom_call.1} parent=1 // pred_fallthru
      _
    // Predicated region
    $region30: #{tpu_custom_call.1} parent=1 // pred_check
      _
    $region31: #{tpu_custom_call.1} parent=1 // pred_check_branch
      %82 = sbr.rel (0) target = $region33
    $region32: #{tpu_custom_call.1} parent=1 // pred_region
      %84 = dma.done [#allocation3], 896
    $region33: #{tpu_custom_call.1} parent=1 // pred_fallthru
      _
    // Predicated region
    $region34: #{tpu_custom_call.1} parent=1 // pred_check
      _
    $region35: #{tpu_custom_call.1} parent=1 // pred_check_branch
      %86 = sbr.rel (0) target = $region37
    $region36: #{tpu_custom_call.1} parent=1 // pred_region
      %88 = dma.done [#allocation6], 18816
    $region37: #{tpu_custom_call.1} parent=1 // pred_fallthru
      _
    // Predicated region
    $region38: #{tpu_custom_call.1} parent=1 // pred_check
      _
    $region39: #{tpu_custom_call.1} parent=1 // pred_check_branch
      %90 = sbr.rel (0) target = $region41
    $region40: #{tpu_custom_call.1} parent=1 // pred_region
      %92 = dma.done [#allocation6], 48
    $region41: #{tpu_custom_call.1} parent=1 // pred_fallthru
      _
    // Predicated region
    $region42: #{tpu_custom_call.1} parent=1 // pred_check
      _
    $region43: #{tpu_custom_call.1} parent=1 // pred_check_branch
      %94 = sbr.rel (0) target = $region45
    $region44: #{tpu_custom_call.1} parent=1 // pred_region
      %96 = dma.done [#allocation9], 3072
    $region45: #{tpu_custom_call.1} parent=1 // pred_fallthru
      _
    // Predicated region
    $region46: #{tpu_custom_call.1} parent=1 // pred_check
      _
    $region47: #{tpu_custom_call.1} parent=1 // pred_check_branch
      %98 = sbr.rel (0) target = $region49
    $region48: #{tpu_custom_call.1} parent=1 // pred_region
      %100 = dma.done [#allocation9], 1024
    $region49: #{tpu_custom_call.1} parent=1 // pred_fallthru
      _
    %v102 = vld [vmem:[#allocation2] sm:$0xff]
    %v103 = vld [vmem:[#allocation2 + $0x8] sm:$0xff]
    %v104 = vld [vmem:[#allocation2 + $0x10] sm:$0xff]
    %v105 = vld [vmem:[#allocation2 + $0x18] sm:$0xff]
    %v106 = vld [vmem:[#allocation2 + $0x20] sm:$0xff]
    %v107 = vld [vmem:[#allocation2 + $0x28] sm:$0xff]
    %v108 = vld [vmem:[#allocation2 + $0x30] sm:$0xff]
    %v109 = vpack.c.bf16 %v102, %v102
    %v110 = vpack.c.bf16 %v103, %v103
    %v111 = vpack.c.bf16 %v104, %v104
    %v112 = vpack.c.bf16 %v105, %v105
    %v113 = vpack.c.bf16 %v106, %v106
    %v114 = vpack.c.bf16 %v107, %v107
    %v115 = vpack.c.bf16 %v108, %v108
    %v116 = vld [vmem:[#allocation5] sm:$0xff]
    %v117 = vld [vmem:[#allocation5 + $0x8] sm:$0xf]
    %v118 = vld [vmem:[#allocation5 + $0xc] sm:$0xff]
    %v119 = vld [vmem:[#allocation5 + $0x14] sm:$0xf]
    %v120 = vld [vmem:[#allocation5 + $0x18] sm:$0xff]
    %v121 = vld [vmem:[#allocation5 + $0x20] sm:$0xf]
    %v122 = vld [vmem:[#allocation5 + $0x24] sm:$0xff]
    %v123 = vld [vmem:[#allocation5 + $0x2c] sm:$0xf]
    %v124 = vld [vmem:[#allocation5 + $0x30] sm:$0xff]
    %v125 = vld [vmem:[#allocation5 + $0x38] sm:$0xf]
    %v126 = vld [vmem:[#allocation5 + $0x3c] sm:$0xff]
    %v127 = vld [vmem:[#allocation5 + $0x44] sm:$0xf]
    %v128 = vld [vmem:[#allocation5 + $0x48] sm:$0xff]
    %v129 = vld [vmem:[#allocation5 + $0x50] sm:$0xf]
    %v130 = vld [vmem:[#allocation5 + $0x54] sm:$0xff]
    %v131 = vld [vmem:[#allocation5 + $0x5c] sm:$0xf]
    %v132 = vld [vmem:[#allocation5 + $0x60] sm:$0xff]
    %v133 = vld [vmem:[#allocation5 + $0x68] sm:$0xf]
    %v134 = vld [vmem:[#allocation5 + $0x6c] sm:$0xff]
    %v135 = vld [vmem:[#allocation5 + $0x74] sm:$0xf]
    %v136 = vld [vmem:[#allocation5 + $0x78] sm:$0xff]
    %v137 = vld [vmem:[#allocation5 + $0x80] sm:$0xf]
    %v138 = vld [vmem:[#allocation5 + $0x84] sm:$0xff]
    %v139 = vld [vmem:[#allocation5 + $0x8c] sm:$0xf]
    %v140 = vld [vmem:[#allocation5 + $0x90] sm:$0xff]
    %v141 = vld [vmem:[#allocation5 + $0x98] sm:$0xf]
    %v142 = vld [vmem:[#allocation5 + $0x9c] sm:$0xff]
    %v143 = vld [vmem:[#allocation5 + $0xa4] sm:$0xf]
    %v144 = vld [vmem:[#allocation5 + $0xa8] sm:$0xff]
    %v145 = vld [vmem:[#allocation5 + $0xb0] sm:$0xf]
    %v146 = vld [vmem:[#allocation5 + $0xb4] sm:$0xff]
    %v147 = vld [vmem:[#allocation5 + $0xbc] sm:$0xf]
    %v148 = vld [vmem:[#allocation5 + $0xc0] sm:$0xff]
    %v149 = vld [vmem:[#allocation5 + $0xc8] sm:$0xf]
    %v150 = vld [vmem:[#allocation5 + $0xcc] sm:$0xff]
    %v151 = vld [vmem:[#allocation5 + $0xd4] sm:$0xf]
    %v152 = vld [vmem:[#allocation5 + $0xd8] sm:$0xff]
    %v153 = vld [vmem:[#allocation5 + $0xe0] sm:$0xf]
    %v154 = vld [vmem:[#allocation5 + $0xe4] sm:$0xff]
    %v155 = vld [vmem:[#allocation5 + $0xec] sm:$0xf]
    %v156 = vld [vmem:[#allocation5 + $0xf0] sm:$0xff]
    %v157 = vld [vmem:[#allocation5 + $0xf8] sm:$0xf]
    %v158 = vld [vmem:[#allocation5 + $0xfc] sm:$0xff]
    %v159 = vld [vmem:[#allocation5 + $0x104] sm:$0xf]
    %v160 = vld [vmem:[#allocation5 + $0x108] sm:$0xff]
    %v161 = vld [vmem:[#allocation5 + $0x110] sm:$0xf]
    %v162 = vld [vmem:[#allocation5 + $0x114] sm:$0xff]
    %v163 = vld [vmem:[#allocation5 + $0x11c] sm:$0xf]
    %v164 = vld [vmem:[#allocation5 + $0x120] sm:$0xff]
    %v165 = vld [vmem:[#allocation5 + $0x128] sm:$0xf]
    %v166 = vld [vmem:[#allocation5 + $0x12c] sm:$0xff]
    %v167 = vld [vmem:[#allocation5 + $0x134] sm:$0xf]
    %v168 = vld [vmem:[#allocation5 + $0x138] sm:$0xff]
    %v169 = vld [vmem:[#allocation5 + $0x140] sm:$0xf]
    %v170 = vld [vmem:[#allocation5 + $0x144] sm:$0xff]
    %v171 = vld [vmem:[#allocation5 + $0x14c] sm:$0xf]
    %v172 = vld [vmem:[#allocation5 + $0x150] sm:$0xff]
    %v173 = vld [vmem:[#allocation5 + $0x158] sm:$0xf]
    %v174 = vld [vmem:[#allocation5 + $0x15c] sm:$0xff]
    %v175 = vld [vmem:[#allocation5 + $0x164] sm:$0xf]
    %v176 = vld [vmem:[#allocation5 + $0x168] sm:$0xff]
    %v177 = vld [vmem:[#allocation5 + $0x170] sm:$0xf]
    %v178 = vld [vmem:[#allocation5 + $0x174] sm:$0xff]
    %v179 = vld [vmem:[#allocation5 + $0x17c] sm:$0xf]
    %v180 = vld [vmem:[#allocation5 + $0x180] sm:$0xff]
    %v181 = vld [vmem:[#allocation5 + $0x188] sm:$0xf]
    %v182 = vld [vmem:[#allocation5 + $0x18c] sm:$0xff]
    %v183 = vld [vmem:[#allocation5 + $0x194] sm:$0xf]
    %v184 = vld [vmem:[#allocation5 + $0x198] sm:$0xff]
    %v185 = vld [vmem:[#allocation5 + $0x1a0] sm:$0xf]
    %v186 = vld [vmem:[#allocation5 + $0x1a4] sm:$0xff]
    %v187 = vld [vmem:[#allocation5 + $0x1ac] sm:$0xf]
    %v188 = vld [vmem:[#allocation5 + $0x1b0] sm:$0xff]
    %v189 = vld [vmem:[#allocation5 + $0x1b8] sm:$0xf]
    %v190 = vld [vmem:[#allocation5 + $0x1bc] sm:$0xff]
    %v191 = vld [vmem:[#allocation5 + $0x1c4] sm:$0xf]
    %v192 = vld [vmem:[#allocation5 + $0x1c8] sm:$0xff]
    %v193 = vld [vmem:[#allocation5 + $0x1d0] sm:$0xf]
    %v194 = vld [vmem:[#allocation5 + $0x1d4] sm:$0xff]
    %v195 = vld [vmem:[#allocation5 + $0x1dc] sm:$0xf]
    %v196 = vld [vmem:[#allocation5 + $0x1e0] sm:$0xff]
    %v197 = vld [vmem:[#allocation5 + $0x1e8] sm:$0xf]
    %v198 = vld [vmem:[#allocation5 + $0x1ec] sm:$0xff]
    %v199 = vld [vmem:[#allocation5 + $0x1f4] sm:$0xf]
    %v200 = vld [vmem:[#allocation5 + $0x1f8] sm:$0xff]
    %v201 = vld [vmem:[#allocation5 + $0x200] sm:$0xf]
    %v202 = vld [vmem:[#allocation5 + $0x204] sm:$0xff]
    %v203 = vld [vmem:[#allocation5 + $0x20c] sm:$0xf]
    %v204 = vld [vmem:[#allocation5 + $0x210] sm:$0xff]
    %v205 = vld [vmem:[#allocation5 + $0x218] sm:$0xf]
    %v206 = vld [vmem:[#allocation5 + $0x21c] sm:$0xff]
    %v207 = vld [vmem:[#allocation5 + $0x224] sm:$0xf]
    %v208 = vld [vmem:[#allocation5 + $0x228] sm:$0xff]
    %v209 = vld [vmem:[#allocation5 + $0x230] sm:$0xf]
    %v210 = vld [vmem:[#allocation5 + $0x234] sm:$0xff]
    %v211 = vld [vmem:[#allocation5 + $0x23c] sm:$0xf]
    %v212 = vld [vmem:[#allocation5 + $0x240] sm:$0xff]
    %v213 = vld [vmem:[#allocation5 + $0x248] sm:$0xf]
    %v214 = vld [vmem:[#allocation5 + $0x24c] sm:$0xff]
    %v215 = vld [vmem:[#allocation5 + $0x254] sm:$0xf]
    %v216 = vld [vmem:[#allocation5 + $0x258] sm:$0xff]
    %v217 = vld [vmem:[#allocation5 + $0x260] sm:$0xf]
    %v218 = vld [vmem:[#allocation5 + $0x264] sm:$0xff]
    %v219 = vld [vmem:[#allocation5 + $0x26c] sm:$0xf]
    %v220 = vld [vmem:[#allocation5 + $0x270] sm:$0xff]
    %v221 = vld [vmem:[#allocation5 + $0x278] sm:$0xf]
    %v222 = vld [vmem:[#allocation5 + $0x27c] sm:$0xff]
    %v223 = vld [vmem:[#allocation5 + $0x284] sm:$0xf]
    %v224 = vld [vmem:[#allocation5 + $0x288] sm:$0xff]
    %v225 = vld [vmem:[#allocation5 + $0x290] sm:$0xf]
    %v226 = vld [vmem:[#allocation5 + $0x294] sm:$0xff]
    %v227 = vld [vmem:[#allocation5 + $0x29c] sm:$0xf]
    %v228 = vld [vmem:[#allocation5 + $0x2a0] sm:$0xff]
    %v229 = vld [vmem:[#allocation5 + $0x2a8] sm:$0xf]
    %v230 = vld [vmem:[#allocation5 + $0x2ac] sm:$0xff]
    %v231 = vld [vmem:[#allocation5 + $0x2b4] sm:$0xf]
    %v232 = vld [vmem:[#allocation5 + $0x2b8] sm:$0xff]
    %v233 = vld [vmem:[#allocation5 + $0x2c0] sm:$0xf]
    %v234 = vld [vmem:[#allocation5 + $0x2c4] sm:$0xff]
    %v235 = vld [vmem:[#allocation5 + $0x2cc] sm:$0xf]
    %v236 = vld [vmem:[#allocation5 + $0x2d0] sm:$0xff]
    %v237 = vld [vmem:[#allocation5 + $0x2d8] sm:$0xf]
    %v238 = vld [vmem:[#allocation5 + $0x2dc] sm:$0xff]
    %v239 = vld [vmem:[#allocation5 + $0x2e4] sm:$0xf]
    %v240 = vld [vmem:[#allocation5 + $0x2e8] sm:$0xff]
    %v241 = vld [vmem:[#allocation5 + $0x2f0] sm:$0xf]
    %v242 = vld [vmem:[#allocation5 + $0x2f4] sm:$0xff]
    %v243 = vld [vmem:[#allocation5 + $0x2fc] sm:$0xf]
    %v244 = vld [vmem:[#allocation5 + $0x300] sm:$0xff]
    %v245 = vld [vmem:[#allocation5 + $0x308] sm:$0xf]
    %v246 = vld [vmem:[#allocation5 + $0x30c] sm:$0xff]
    %v247 = vld [vmem:[#allocation5 + $0x314] sm:$0xf]
    %v248 = vld [vmem:[#allocation5 + $0x318] sm:$0xff]
    %v249 = vld [vmem:[#allocation5 + $0x320] sm:$0xf]
    %v250 = vld [vmem:[#allocation5 + $0x324] sm:$0xff]
    %v251 = vld [vmem:[#allocation5 + $0x32c] sm:$0xf]
    %v252 = vld [vmem:[#allocation5 + $0x330] sm:$0xff]
    %v253 = vld [vmem:[#allocation5 + $0x338] sm:$0xf]
    %v254 = vld [vmem:[#allocation5 + $0x33c] sm:$0xff]
    %v255 = vld [vmem:[#allocation5 + $0x344] sm:$0xf]
    %v256 = vld [vmem:[#allocation5 + $0x348] sm:$0xff]
    %v257 = vld [vmem:[#allocation5 + $0x350] sm:$0xf]
    %v258 = vld [vmem:[#allocation5 + $0x354] sm:$0xff]
    %v259 = vld [vmem:[#allocation5 + $0x35c] sm:$0xf]
    %v260 = vld [vmem:[#allocation5 + $0x360] sm:$0xff]
    %v261 = vld [vmem:[#allocation5 + $0x368] sm:$0xf]
    %v262 = vld [vmem:[#allocation5 + $0x36c] sm:$0xff]
    %v263 = vld [vmem:[#allocation5 + $0x374] sm:$0xf]
    %v264 = vld [vmem:[#allocation5 + $0x378] sm:$0xff]
    %v265 = vld [vmem:[#allocation5 + $0x380] sm:$0xf]
    %v266 = vld [vmem:[#allocation5 + $0x384] sm:$0xff]
    %v267 = vld [vmem:[#allocation5 + $0x38c] sm:$0xf]
    %v268 = vld [vmem:[#allocation5 + $0x390] sm:$0xff]
    %v269 = vld [vmem:[#allocation5 + $0x398] sm:$0xf]
    %v270 = vld [vmem:[#allocation5 + $0x39c] sm:$0xff]
    %v271 = vld [vmem:[#allocation5 + $0x3a4] sm:$0xf]
    %v272 = vld [vmem:[#allocation5 + $0x3a8] sm:$0xff]
    %v273 = vld [vmem:[#allocation5 + $0x3b0] sm:$0xf]
    %v274 = vld [vmem:[#allocation5 + $0x3b4] sm:$0xff]
    %v275 = vld [vmem:[#allocation5 + $0x3bc] sm:$0xf]
    %v276 = vld [vmem:[#allocation5 + $0x3c0] sm:$0xff]
    %v277 = vld [vmem:[#allocation5 + $0x3c8] sm:$0xf]
    %v278 = vld [vmem:[#allocation5 + $0x3cc] sm:$0xff]
    %v279 = vld [vmem:[#allocation5 + $0x3d4] sm:$0xf]
    %v280 = vld [vmem:[#allocation5 + $0x3d8] sm:$0xff]
    %v281 = vld [vmem:[#allocation5 + $0x3e0] sm:$0xf]
    %v282 = vld [vmem:[#allocation5 + $0x3e4] sm:$0xff]
    %v283 = vld [vmem:[#allocation5 + $0x3ec] sm:$0xf]
    %v284 = vld [vmem:[#allocation5 + $0x3f0] sm:$0xff]
    %v285 = vld [vmem:[#allocation5 + $0x3f8] sm:$0xf]
    %v286 = vld [vmem:[#allocation5 + $0x3fc] sm:$0xff]
    %v287 = vld [vmem:[#allocation5 + $0x404] sm:$0xf]
    %v288 = vld [vmem:[#allocation5 + $0x408] sm:$0xff]
    %v289 = vld [vmem:[#allocation5 + $0x410] sm:$0xf]
    %v290 = vld [vmem:[#allocation5 + $0x414] sm:$0xff]
    %v291 = vld [vmem:[#allocation5 + $0x41c] sm:$0xf]
    %v292 = vld [vmem:[#allocation5 + $0x420] sm:$0xff]
    %v293 = vld [vmem:[#allocation5 + $0x428] sm:$0xf]
    %v294 = vld [vmem:[#allocation5 + $0x42c] sm:$0xff]
    %v295 = vld [vmem:[#allocation5 + $0x434] sm:$0xf]
    %v296 = vld [vmem:[#allocation5 + $0x438] sm:$0xff]
    %v297 = vld [vmem:[#allocation5 + $0x440] sm:$0xf]
    %v298 = vld [vmem:[#allocation5 + $0x444] sm:$0xff]
    %v299 = vld [vmem:[#allocation5 + $0x44c] sm:$0xf]
    %v300 = vld [vmem:[#allocation5 + $0x450] sm:$0xff]
    %v301 = vld [vmem:[#allocation5 + $0x458] sm:$0xf]
    %v302 = vld [vmem:[#allocation5 + $0x45c] sm:$0xff]
    %v303 = vld [vmem:[#allocation5 + $0x464] sm:$0xf]
    %v304 = vld [vmem:[#allocation5 + $0x468] sm:$0xff]
    %v305 = vld [vmem:[#allocation5 + $0x470] sm:$0xf]
    %v306 = vld [vmem:[#allocation5 + $0x474] sm:$0xff]
    %v307 = vld [vmem:[#allocation5 + $0x47c] sm:$0xf]
    %v308 = vld [vmem:[#allocation5 + $0x480] sm:$0xff]
    %v309 = vld [vmem:[#allocation5 + $0x488] sm:$0xf]
    %v310 = vld [vmem:[#allocation5 + $0x48c] sm:$0xff]
    %v311 = vld [vmem:[#allocation5 + $0x494] sm:$0xf]
    %v312 = vld [vmem:[#allocation7] sm:$0x7]
    %v314 = vperm.slane %v312, 0
    %v315 = vperm.slane %v312, 1
    %v316 = vperm.slane %v312, 2
    %v516 = vunpack.c.l.b16 %v116
    %v517 = vunpack.c.h.b16 %v116
    %v518 = vunpack.c.l.b16 %v117
    %v519 = vunpack.c.l.b16 %v118
    %v520 = vunpack.c.h.b16 %v118
    %v521 = vunpack.c.l.b16 %v119
    %v522 = vunpack.c.l.b16 %v120
    %v523 = vunpack.c.h.b16 %v120
    %v524 = vunpack.c.l.b16 %v121
    %v525 = vunpack.c.l.b16 %v122
    %v526 = vunpack.c.h.b16 %v122
    %v527 = vunpack.c.l.b16 %v123
    %v528 = vunpack.c.l.b16 %v124
    %v529 = vunpack.c.h.b16 %v124
    %v530 = vunpack.c.l.b16 %v125
    %v531 = vunpack.c.l.b16 %v126
    %v532 = vunpack.c.h.b16 %v126
    %v533 = vunpack.c.l.b16 %v127
    %v534 = vunpack.c.l.b16 %v128
    %v535 = vunpack.c.h.b16 %v128
    %v536 = vunpack.c.l.b16 %v129
    %v537 = vunpack.c.l.b16 %v130
    %v538 = vunpack.c.h.b16 %v130
    %v539 = vunpack.c.l.b16 %v131
    %v540 = vunpack.c.l.b16 %v132
    %v541 = vunpack.c.h.b16 %v132
    %v542 = vunpack.c.l.b16 %v133
    %v543 = vunpack.c.l.b16 %v134
    %v544 = vunpack.c.h.b16 %v134
    %v545 = vunpack.c.l.b16 %v135
    %v546 = vunpack.c.l.b16 %v136
    %v547 = vunpack.c.h.b16 %v136
    %v548 = vunpack.c.l.b16 %v137
    %v549 = vunpack.c.l.b16 %v138
    %v550 = vunpack.c.h.b16 %v138
    %v551 = vunpack.c.l.b16 %v139
    %v552 = vunpack.c.l.b16 %v140
    %v553 = vunpack.c.h.b16 %v140
    %v554 = vunpack.c.l.b16 %v141
    %v555 = vunpack.c.l.b16 %v142
    %v556 = vunpack.c.h.b16 %v142
    %v557 = vunpack.c.l.b16 %v143
    %v558 = vunpack.c.l.b16 %v144
    %v559 = vunpack.c.h.b16 %v144
    %v560 = vunpack.c.l.b16 %v145
    %v561 = vunpack.c.l.b16 %v146
    %v562 = vunpack.c.h.b16 %v146
    %v563 = vunpack.c.l.b16 %v147
    %v564 = vunpack.c.l.b16 %v148
    %v565 = vunpack.c.h.b16 %v148
    %v566 = vunpack.c.l.b16 %v149
    %v567 = vunpack.c.l.b16 %v150
    %v568 = vunpack.c.h.b16 %v150
    %v569 = vunpack.c.l.b16 %v151
    %v570 = vunpack.c.l.b16 %v152
    %v571 = vunpack.c.h.b16 %v152
    %v572 = vunpack.c.l.b16 %v153
    %v573 = vunpack.c.l.b16 %v154
    %v574 = vunpack.c.h.b16 %v154
    %v575 = vunpack.c.l.b16 %v155
    %v576 = vunpack.c.l.b16 %v156
    %v577 = vunpack.c.h.b16 %v156
    %v578 = vunpack.c.l.b16 %v157
    %v579 = vunpack.c.l.b16 %v158
    %v580 = vunpack.c.h.b16 %v158
    %v581 = vunpack.c.l.b16 %v159
    %v582 = vunpack.c.l.b16 %v160
    %v583 = vunpack.c.h.b16 %v160
    %v584 = vunpack.c.l.b16 %v161
    %v585 = vunpack.c.l.b16 %v162
    %v586 = vunpack.c.h.b16 %v162
    %v587 = vunpack.c.l.b16 %v163
    %v588 = vunpack.c.l.b16 %v164
    %v589 = vunpack.c.h.b16 %v164
    %v590 = vunpack.c.l.b16 %v165
    %v591 = vunpack.c.l.b16 %v166
    %v592 = vunpack.c.h.b16 %v166
    %v593 = vunpack.c.l.b16 %v167
    %v594 = vunpack.c.l.b16 %v168
    %v595 = vunpack.c.h.b16 %v168
    %v596 = vunpack.c.l.b16 %v169
    %v597 = vunpack.c.l.b16 %v170
    %v598 = vunpack.c.h.b16 %v170
    %v599 = vunpack.c.l.b16 %v171
    %v600 = vunpack.c.l.b16 %v172
    %v601 = vunpack.c.h.b16 %v172
    %v602 = vunpack.c.l.b16 %v173
    %v603 = vunpack.c.l.b16 %v174
    %v604 = vunpack.c.h.b16 %v174
    %v605 = vunpack.c.l.b16 %v175
    %v606 = vunpack.c.l.b16 %v176
    %v607 = vunpack.c.h.b16 %v176
    %v608 = vunpack.c.l.b16 %v177
    %v609 = vunpack.c.l.b16 %v178
    %v610 = vunpack.c.h.b16 %v178
    %v611 = vunpack.c.l.b16 %v179
    %v612 = vunpack.c.l.b16 %v180
    %v613 = vunpack.c.h.b16 %v180
    %v614 = vunpack.c.l.b16 %v181
    %v615 = vunpack.c.l.b16 %v182
    %v616 = vunpack.c.h.b16 %v182
    %v617 = vunpack.c.l.b16 %v183
    %v618 = vunpack.c.l.b16 %v184
    %v619 = vunpack.c.h.b16 %v184
    %v620 = vunpack.c.l.b16 %v185
    %v621 = vunpack.c.l.b16 %v186
    %v622 = vunpack.c.h.b16 %v186
    %v623 = vunpack.c.l.b16 %v187
    %v624 = vunpack.c.l.b16 %v188
    %v625 = vunpack.c.h.b16 %v188
    %v626 = vunpack.c.l.b16 %v189
    %v627 = vunpack.c.l.b16 %v190
    %v628 = vunpack.c.h.b16 %v190
    %v629 = vunpack.c.l.b16 %v191
    %v630 = vunpack.c.l.b16 %v192
    %v631 = vunpack.c.h.b16 %v192
    %v632 = vunpack.c.l.b16 %v193
    %v633 = vunpack.c.l.b16 %v194
    %v634 = vunpack.c.h.b16 %v194
    %v635 = vunpack.c.l.b16 %v195
    %v636 = vunpack.c.l.b16 %v196
    %v637 = vunpack.c.h.b16 %v196
    %v638 = vunpack.c.l.b16 %v197
    %v639 = vunpack.c.l.b16 %v198
    %v640 = vunpack.c.h.b16 %v198
    %v641 = vunpack.c.l.b16 %v199
    %v642 = vunpack.c.l.b16 %v200
    %v643 = vunpack.c.h.b16 %v200
    %v644 = vunpack.c.l.b16 %v201
    %v645 = vunpack.c.l.b16 %v202
    %v646 = vunpack.c.h.b16 %v202
    %v647 = vunpack.c.l.b16 %v203
    %v648 = vunpack.c.l.b16 %v204
    %v649 = vunpack.c.h.b16 %v204
    %v650 = vunpack.c.l.b16 %v205
    %v651 = vunpack.c.l.b16 %v206
    %v652 = vunpack.c.h.b16 %v206
    %v653 = vunpack.c.l.b16 %v207
    %v654 = vunpack.c.l.b16 %v208
    %v655 = vunpack.c.h.b16 %v208
    %v656 = vunpack.c.l.b16 %v209
    %v657 = vunpack.c.l.b16 %v210
    %v658 = vunpack.c.h.b16 %v210
    %v659 = vunpack.c.l.b16 %v211
    %v660 = vunpack.c.l.b16 %v212
    %v661 = vunpack.c.h.b16 %v212
    %v662 = vunpack.c.l.b16 %v213
    %v663 = vunpack.c.l.b16 %v214
    %v664 = vunpack.c.h.b16 %v214
    %v665 = vunpack.c.l.b16 %v215
    %v666 = vunpack.c.l.b16 %v216
    %v667 = vunpack.c.h.b16 %v216
    %v668 = vunpack.c.l.b16 %v217
    %v669 = vunpack.c.l.b16 %v218
    %v670 = vunpack.c.h.b16 %v218
    %v671 = vunpack.c.l.b16 %v219
    %v672 = vunpack.c.l.b16 %v220
    %v673 = vunpack.c.h.b16 %v220
    %v674 = vunpack.c.l.b16 %v221
    %v675 = vunpack.c.l.b16 %v222
    %v676 = vunpack.c.h.b16 %v222
    %v677 = vunpack.c.l.b16 %v223
    %v678 = vunpack.c.l.b16 %v224
    %v679 = vunpack.c.h.b16 %v224
    %v680 = vunpack.c.l.b16 %v225
    %v681 = vunpack.c.l.b16 %v226
    %v682 = vunpack.c.h.b16 %v226
    %v683 = vunpack.c.l.b16 %v227
    %v684 = vunpack.c.l.b16 %v228
    %v685 = vunpack.c.h.b16 %v228
    %v686 = vunpack.c.l.b16 %v229
    %v687 = vunpack.c.l.b16 %v230
    %v688 = vunpack.c.h.b16 %v230
    %v689 = vunpack.c.l.b16 %v231
    %v690 = vunpack.c.l.b16 %v232
    %v691 = vunpack.c.h.b16 %v232
    %v692 = vunpack.c.l.b16 %v233
    %v693 = vunpack.c.l.b16 %v234
    %v694 = vunpack.c.h.b16 %v234
    %v695 = vunpack.c.l.b16 %v235
    %v696 = vunpack.c.l.b16 %v236
    %v697 = vunpack.c.h.b16 %v236
    %v698 = vunpack.c.l.b16 %v237
    %v699 = vunpack.c.l.b16 %v238
    %v700 = vunpack.c.h.b16 %v238
    %v701 = vunpack.c.l.b16 %v239
    %v702 = vunpack.c.l.b16 %v240
    %v703 = vunpack.c.h.b16 %v240
    %v704 = vunpack.c.l.b16 %v241
    %v705 = vunpack.c.l.b16 %v242
    %v706 = vunpack.c.h.b16 %v242
    %v707 = vunpack.c.l.b16 %v243
    %v708 = vunpack.c.l.b16 %v244
    %v709 = vunpack.c.h.b16 %v244
    %v710 = vunpack.c.l.b16 %v245
    %v711 = vunpack.c.l.b16 %v246
    %v712 = vunpack.c.h.b16 %v246
    %v713 = vunpack.c.l.b16 %v247
    %v714 = vunpack.c.l.b16 %v248
    %v715 = vunpack.c.h.b16 %v248
    %v716 = vunpack.c.l.b16 %v249
    %v717 = vunpack.c.l.b16 %v250
    %v718 = vunpack.c.h.b16 %v250
    %v719 = vunpack.c.l.b16 %v251
    %v720 = vunpack.c.l.b16 %v252
    %v721 = vunpack.c.h.b16 %v252
    %v722 = vunpack.c.l.b16 %v253
    %v723 = vunpack.c.l.b16 %v254
    %v724 = vunpack.c.h.b16 %v254
    %v725 = vunpack.c.l.b16 %v255
    %v726 = vunpack.c.l.b16 %v256
    %v727 = vunpack.c.h.b16 %v256
    %v728 = vunpack.c.l.b16 %v257
    %v729 = vunpack.c.l.b16 %v258
    %v730 = vunpack.c.h.b16 %v258
    %v731 = vunpack.c.l.b16 %v259
    %v732 = vunpack.c.l.b16 %v260
    %v733 = vunpack.c.h.b16 %v260
    %v734 = vunpack.c.l.b16 %v261
    %v735 = vunpack.c.l.b16 %v262
    %v736 = vunpack.c.h.b16 %v262
    %v737 = vunpack.c.l.b16 %v263
    %v738 = vunpack.c.l.b16 %v264
    %v739 = vunpack.c.h.b16 %v264
    %v740 = vunpack.c.l.b16 %v265
    %v741 = vunpack.c.l.b16 %v266
    %v742 = vunpack.c.h.b16 %v266
    %v743 = vunpack.c.l.b16 %v267
    %v744 = vunpack.c.l.b16 %v268
    %v745 = vunpack.c.h.b16 %v268
    %v746 = vunpack.c.l.b16 %v269
    %v747 = vunpack.c.l.b16 %v270
    %v748 = vunpack.c.h.b16 %v270
    %v749 = vunpack.c.l.b16 %v271
    %v750 = vunpack.c.l.b16 %v272
    %v751 = vunpack.c.h.b16 %v272
    %v752 = vunpack.c.l.b16 %v273
    %v753 = vunpack.c.l.b16 %v274
    %v754 = vunpack.c.h.b16 %v274
    %v755 = vunpack.c.l.b16 %v275
    %v756 = vunpack.c.l.b16 %v276
    %v757 = vunpack.c.h.b16 %v276
    %v758 = vunpack.c.l.b16 %v277
    %v759 = vunpack.c.l.b16 %v278
    %v760 = vunpack.c.h.b16 %v278
    %v761 = vunpack.c.l.b16 %v279
    %v762 = vunpack.c.l.b16 %v280
    %v763 = vunpack.c.h.b16 %v280
    %v764 = vunpack.c.l.b16 %v281
    %v765 = vunpack.c.l.b16 %v282
    %v766 = vunpack.c.h.b16 %v282
    %v767 = vunpack.c.l.b16 %v283
    %v768 = vunpack.c.l.b16 %v284
    %v769 = vunpack.c.h.b16 %v284
    %v770 = vunpack.c.l.b16 %v285
    %v771 = vunpack.c.l.b16 %v286
    %v772 = vunpack.c.h.b16 %v286
    %v773 = vunpack.c.l.b16 %v287
    %v774 = vunpack.c.l.b16 %v288
    %v775 = vunpack.c.h.b16 %v288
    %v776 = vunpack.c.l.b16 %v289
    %v777 = vunpack.c.l.b16 %v290
    %v778 = vunpack.c.h.b16 %v290
    %v779 = vunpack.c.l.b16 %v291
    %v780 = vunpack.c.l.b16 %v292
    %v781 = vunpack.c.h.b16 %v292
    %v782 = vunpack.c.l.b16 %v293
    %v783 = vunpack.c.l.b16 %v294
    %v784 = vunpack.c.h.b16 %v294
    %v785 = vunpack.c.l.b16 %v295
    %v786 = vunpack.c.l.b16 %v296
    %v787 = vunpack.c.h.b16 %v296
    %v788 = vunpack.c.l.b16 %v297
    %v789 = vunpack.c.l.b16 %v298
    %v790 = vunpack.c.h.b16 %v298
    %v791 = vunpack.c.l.b16 %v299
    %v792 = vunpack.c.l.b16 %v300
    %v793 = vunpack.c.h.b16 %v300
    %v794 = vunpack.c.l.b16 %v301
    %v795 = vunpack.c.l.b16 %v302
    %v796 = vunpack.c.h.b16 %v302
    %v797 = vunpack.c.l.b16 %v303
    %v798 = vunpack.c.l.b16 %v304
    %v799 = vunpack.c.h.b16 %v304
    %v800 = vunpack.c.l.b16 %v305
    %v801 = vunpack.c.l.b16 %v306
    %v802 = vunpack.c.h.b16 %v306
    %v803 = vunpack.c.l.b16 %v307
    %v804 = vunpack.c.l.b16 %v308
    %v805 = vunpack.c.h.b16 %v308
    %v806 = vunpack.c.l.b16 %v309
    %v807 = vunpack.c.l.b16 %v310
    %v808 = vunpack.c.h.b16 %v310
    %v809 = vunpack.c.l.b16 %v311
    %v810 = vpack.c.b16 %v519, %v516
    %v811 = vpack.c.b16 %v520, %v517
    %v812 = vpack.c.b16 %v521, %v518
    %v813 = vpack.c.b16 %v525, %v522
    %v814 = vpack.c.b16 %v526, %v523
    %v815 = vpack.c.b16 %v527, %v524
    %v816 = vpack.c.b16 %v531, %v528
    %v817 = vpack.c.b16 %v532, %v529
    %v818 = vpack.c.b16 %v533, %v530
    %v819 = vpack.c.b16 %v537, %v534
    %v820 = vpack.c.b16 %v538, %v535
    %v821 = vpack.c.b16 %v539, %v536
    %v822 = vpack.c.b16 %v543, %v540
    %v823 = vpack.c.b16 %v544, %v541
    %v824 = vpack.c.b16 %v545, %v542
    %v825 = vpack.c.b16 %v549, %v546
    %v826 = vpack.c.b16 %v550, %v547
    %v827 = vpack.c.b16 %v551, %v548
    %v828 = vpack.c.b16 %v555, %v552
    %v829 = vpack.c.b16 %v556, %v553
    %v830 = vpack.c.b16 %v557, %v554
    %v831 = vpack.c.b16 %v561, %v558
    %v832 = vpack.c.b16 %v562, %v559
    %v833 = vpack.c.b16 %v563, %v560
    %v834 = vpack.c.b16 %v567, %v564
    %v835 = vpack.c.b16 %v568, %v565
    %v836 = vpack.c.b16 %v569, %v566
    %v837 = vpack.c.b16 %v573, %v570
    %v838 = vpack.c.b16 %v574, %v571
    %v839 = vpack.c.b16 %v575, %v572
    %v840 = vpack.c.b16 %v579, %v576
    %v841 = vpack.c.b16 %v580, %v577
    %v842 = vpack.c.b16 %v581, %v578
    %v843 = vpack.c.b16 %v585, %v582
    %v844 = vpack.c.b16 %v586, %v583
    %v845 = vpack.c.b16 %v587, %v584
    %v846 = vpack.c.b16 %v591, %v588
    %v847 = vpack.c.b16 %v592, %v589
    %v848 = vpack.c.b16 %v593, %v590
    %v849 = vpack.c.b16 %v597, %v594
    %v850 = vpack.c.b16 %v598, %v595
    %v851 = vpack.c.b16 %v599, %v596
    %v852 = vpack.c.b16 %v603, %v600
    %v853 = vpack.c.b16 %v604, %v601
    %v854 = vpack.c.b16 %v605, %v602
    %v855 = vpack.c.b16 %v609, %v606
    %v856 = vpack.c.b16 %v610, %v607
    %v857 = vpack.c.b16 %v611, %v608
    %v858 = vpack.c.b16 %v615, %v612
    %v859 = vpack.c.b16 %v616, %v613
    %v860 = vpack.c.b16 %v617, %v614
    %v861 = vpack.c.b16 %v621, %v618
    %v862 = vpack.c.b16 %v622, %v619
    %v863 = vpack.c.b16 %v623, %v620
    %v864 = vpack.c.b16 %v627, %v624
    %v865 = vpack.c.b16 %v628, %v625
    %v866 = vpack.c.b16 %v629, %v626
    %v867 = vpack.c.b16 %v633, %v630
    %v868 = vpack.c.b16 %v634, %v631
    %v869 = vpack.c.b16 %v635, %v632
    %v870 = vpack.c.b16 %v639, %v636
    %v871 = vpack.c.b16 %v640, %v637
    %v872 = vpack.c.b16 %v641, %v638
    %v873 = vpack.c.b16 %v645, %v642
    %v874 = vpack.c.b16 %v646, %v643
    %v875 = vpack.c.b16 %v647, %v644
    %v876 = vpack.c.b16 %v651, %v648
    %v877 = vpack.c.b16 %v652, %v649
    %v878 = vpack.c.b16 %v653, %v650
    %v879 = vpack.c.b16 %v657, %v654
    %v880 = vpack.c.b16 %v658, %v655
    %v881 = vpack.c.b16 %v659, %v656
    %v882 = vpack.c.b16 %v663, %v660
    %v883 = vpack.c.b16 %v664, %v661
    %v884 = vpack.c.b16 %v665, %v662
    %v885 = vpack.c.b16 %v669, %v666
    %v886 = vpack.c.b16 %v670, %v667
    %v887 = vpack.c.b16 %v671, %v668
    %v888 = vpack.c.b16 %v675, %v672
    %v889 = vpack.c.b16 %v676, %v673
    %v890 = vpack.c.b16 %v677, %v674
    %v891 = vpack.c.b16 %v681, %v678
    %v892 = vpack.c.b16 %v682, %v679
    %v893 = vpack.c.b16 %v683, %v680
    %v894 = vpack.c.b16 %v687, %v684
    %v895 = vpack.c.b16 %v688, %v685
    %v896 = vpack.c.b16 %v689, %v686
    %v897 = vpack.c.b16 %v693, %v690
    %v898 = vpack.c.b16 %v694, %v691
    %v899 = vpack.c.b16 %v695, %v692
    %v900 = vpack.c.b16 %v699, %v696
    %v901 = vpack.c.b16 %v700, %v697
    %v902 = vpack.c.b16 %v701, %v698
    %v903 = vpack.c.b16 %v705, %v702
    %v904 = vpack.c.b16 %v706, %v703
    %v905 = vpack.c.b16 %v707, %v704
    %v906 = vpack.c.b16 %v711, %v708
    %v907 = vpack.c.b16 %v712, %v709
    %v908 = vpack.c.b16 %v713, %v710
    %v909 = vpack.c.b16 %v717, %v714
    %v910 = vpack.c.b16 %v718, %v715
    %v911 = vpack.c.b16 %v719, %v716
    %v912 = vpack.c.b16 %v723, %v720
    %v913 = vpack.c.b16 %v724, %v721
    %v914 = vpack.c.b16 %v725, %v722
    %v915 = vpack.c.b16 %v729, %v726
    %v916 = vpack.c.b16 %v730, %v727
    %v917 = vpack.c.b16 %v731, %v728
    %v918 = vpack.c.b16 %v735, %v732
    %v919 = vpack.c.b16 %v736, %v733
    %v920 = vpack.c.b16 %v737, %v734
    %v921 = vpack.c.b16 %v741, %v738
    %v922 = vpack.c.b16 %v742, %v739
    %v923 = vpack.c.b16 %v743, %v740
    %v924 = vpack.c.b16 %v747, %v744
    %v925 = vpack.c.b16 %v748, %v745
    %v926 = vpack.c.b16 %v749, %v746
    %v927 = vpack.c.b16 %v753, %v750
    %v928 = vpack.c.b16 %v754, %v751
    %v929 = vpack.c.b16 %v755, %v752
    %v930 = vpack.c.b16 %v759, %v756
    %v931 = vpack.c.b16 %v760, %v757
    %v932 = vpack.c.b16 %v761, %v758
    %v933 = vpack.c.b16 %v765, %v762
    %v934 = vpack.c.b16 %v766, %v763
    %v935 = vpack.c.b16 %v767, %v764
    %v936 = vpack.c.b16 %v771, %v768
    %v937 = vpack.c.b16 %v772, %v769
    %v938 = vpack.c.b16 %v773, %v770
    %v939 = vpack.c.b16 %v777, %v774
    %v940 = vpack.c.b16 %v778, %v775
    %v941 = vpack.c.b16 %v779, %v776
    %v942 = vpack.c.b16 %v783, %v780
    %v943 = vpack.c.b16 %v784, %v781
    %v944 = vpack.c.b16 %v785, %v782
    %v945 = vpack.c.b16 %v789, %v786
    %v946 = vpack.c.b16 %v790, %v787
    %v947 = vpack.c.b16 %v791, %v788
    %v948 = vpack.c.b16 %v795, %v792
    %v949 = vpack.c.b16 %v796, %v793
    %v950 = vpack.c.b16 %v797, %v794
    %v951 = vpack.c.b16 %v801, %v798
    %v952 = vpack.c.b16 %v802, %v799
    %v953 = vpack.c.b16 %v803, %v800
    %v954 = vpack.c.b16 %v807, %v804
    %v955 = vpack.c.b16 %v808, %v805
    %v956 = vpack.c.b16 %v809, %v806
    %vm1104 = vcmask 130048
    %v1106 = vsel %vm1104, %v115, 0
    %1108 = vmatpush.bf16.msra.mxu0 %v831
    %1109 = vmatpush.bf16.msra.mxu0 %v828
    %1110 = vmatpush.bf16.msra.mxu0 %v825
    %1111 = vmatpush.bf16.msra.mxu0 %v822
    %1112 = vmatpush.bf16.msra.mxu0 %v819
    %1113 = vmatpush.bf16.msra.mxu0 %v816
    %1114 = vmatpush.bf16.msra.mxu0 %v813
    %1115 = vmatpush.bf16.msra.mxu0 %v810
    %1116 = vmatmul.bf16.gmra.mxu0 %v109
    %v1117 = vpop.f32.mrf.mxu0
    %v1118 = vadd.f32 %v314, %v1117
    %v1119 = vpop.f32.mrf.mxu0
    %1120 = vdwg.mxu0
    %1121 = vmatpush.bf16.msra.mxu0 %v855
    %1122 = vmatpush.bf16.msra.mxu0 %v852
    %1123 = vmatpush.bf16.msra.mxu0 %v849
    %1124 = vmatpush.bf16.msra.mxu0 %v846
    %1125 = vmatpush.bf16.msra.mxu0 %v843
    %1126 = vmatpush.bf16.msra.mxu0 %v840
    %1127 = vmatpush.bf16.msra.mxu0 %v837
    %1128 = vmatpush.bf16.msra.mxu0 %v834
    %1129 = vmatmul.bf16.gmra.mxu0 %v110
    %v1130 = vpop.f32.mrf.mxu0
    %v1131 = vadd.f32 %v1118, %v1130
    %v1132 = vpop.f32.mrf.mxu0
    %1133 = vdwg.mxu0
    %1134 = vmatpush.bf16.msra.mxu0 %v879
    %1135 = vmatpush.bf16.msra.mxu0 %v876
    %1136 = vmatpush.bf16.msra.mxu0 %v873
    %1137 = vmatpush.bf16.msra.mxu0 %v870
    %1138 = vmatpush.bf16.msra.mxu0 %v867
    %1139 = vmatpush.bf16.msra.mxu0 %v864
    %1140 = vmatpush.bf16.msra.mxu0 %v861
    %1141 = vmatpush.bf16.msra.mxu0 %v858
    %1142 = vmatmul.bf16.gmra.mxu0 %v111
    %v1143 = vpop.f32.mrf.mxu0
    %v1144 = vadd.f32 %v1131, %v1143
    %v1145 = vpop.f32.mrf.mxu0
    %1146 = vdwg.mxu0
    %1147 = vmatpush.bf16.msra.mxu0 %v903
    %1148 = vmatpush.bf16.msra.mxu0 %v900
    %1149 = vmatpush.bf16.msra.mxu0 %v897
    %1150 = vmatpush.bf16.msra.mxu0 %v894
    %1151 = vmatpush.bf16.msra.mxu0 %v891
    %1152 = vmatpush.bf16.msra.mxu0 %v888
    %1153 = vmatpush.bf16.msra.mxu0 %v885
    %1154 = vmatpush.bf16.msra.mxu0 %v882
    %1155 = vmatmul.bf16.gmra.mxu0 %v112
    %v1156 = vpop.f32.mrf.mxu0
    %v1157 = vadd.f32 %v1144, %v1156
    %v1158 = vpop.f32.mrf.mxu0
    %1159 = vdwg.mxu0
    %1160 = vmatpush.bf16.msra.mxu0 %v927
    %1161 = vmatpush.bf16.msra.mxu0 %v924
    %1162 = vmatpush.bf16.msra.mxu0 %v921
    %1163 = vmatpush.bf16.msra.mxu0 %v918
    %1164 = vmatpush.bf16.msra.mxu0 %v915
    %1165 = vmatpush.bf16.msra.mxu0 %v912
    %1166 = vmatpush.bf16.msra.mxu0 %v909
    %1167 = vmatpush.bf16.msra.mxu0 %v906
    %1168 = vmatmul.bf16.gmra.mxu0 %v113
    %v1169 = vpop.f32.mrf.mxu0
    %v1170 = vadd.f32 %v1157, %v1169
    %v1171 = vpop.f32.mrf.mxu0
    %1172 = vdwg.mxu0
    %1173 = vmatpush.bf16.msra.mxu0 %v951
    %1174 = vmatpush.bf16.msra.mxu0 %v948
    %1175 = vmatpush.bf16.msra.mxu0 %v945
    %1176 = vmatpush.bf16.msra.mxu0 %v942
    %1177 = vmatpush.bf16.msra.mxu0 %v939
    %1178 = vmatpush.bf16.msra.mxu0 %v936
    %1179 = vmatpush.bf16.msra.mxu0 %v933
    %1180 = vmatpush.bf16.msra.mxu0 %v930
    %1181 = vmatmul.bf16.gmra.mxu0 %v114
    %v1182 = vpop.f32.mrf.mxu0
    %v1183 = vadd.f32 %v1170, %v1182
    %v1184 = vpop.f32.mrf.mxu0
    %1185 = vdwg.mxu0
    %1186 = vmatpush.bf16.msra.mxu0 0
    %1187 = vmatpush.bf16.msra.mxu0 0
    %1188 = vmatpush.bf16.msra.mxu0 0
    %1189 = vmatpush.bf16.msra.mxu0 0
    %1190 = vmatpush.bf16.msra.mxu0 0
    %1191 = vmatpush.bf16.msra.mxu0 0
    %1192 = vmatpush.bf16.msra.mxu0 0
    %1193 = vmatpush.bf16.msra.mxu0 %v954
    %1194 = vmatmul.bf16.gmra.mxu0 %v1106
    %v1195 = vpop.f32.mrf.mxu0
    %v1196 = vadd.f32 %v1183, %v1195
    %v1197 = vpop.f32.mrf.mxu0
    %1198 = vdwg.mxu0
    %1199 = vmatpush.bf16.msra.mxu0 %v832
    %1200 = vmatpush.bf16.msra.mxu0 %v829
    %1201 = vmatpush.bf16.msra.mxu0 %v826
    %1202 = vmatpush.bf16.msra.mxu0 %v823
    %1203 = vmatpush.bf16.msra.mxu0 %v820
    %1204 = vmatpush.bf16.msra.mxu0 %v817
    %1205 = vmatpush.bf16.msra.mxu0 %v814
    %1206 = vmatpush.bf16.msra.mxu0 %v811
    %1207 = vmatmul.bf16.gmra.mxu0 %v109
    %v1208 = vpop.f32.mrf.mxu0
    %v1209 = vadd.f32 %v315, %v1208
    %v1210 = vpop.f32.mrf.mxu0
    %1211 = vdwg.mxu0
    %1212 = vmatpush.bf16.msra.mxu0 %v856
    %1213 = vmatpush.bf16.msra.mxu0 %v853
    %1214 = vmatpush.bf16.msra.mxu0 %v850
    %1215 = vmatpush.bf16.msra.mxu0 %v847
    %1216 = vmatpush.bf16.msra.mxu0 %v844
    %1217 = vmatpush.bf16.msra.mxu0 %v841
    %1218 = vmatpush.bf16.msra.mxu0 %v838
    %1219 = vmatpush.bf16.msra.mxu0 %v835
    %1220 = vmatmul.bf16.gmra.mxu0 %v110
    %v1221 = vpop.f32.mrf.mxu0
    %v1222 = vadd.f32 %v1209, %v1221
    %v1223 = vpop.f32.mrf.mxu0
    %1224 = vdwg.mxu0
    %1225 = vmatpush.bf16.msra.mxu0 %v880
    %1226 = vmatpush.bf16.msra.mxu0 %v877
    %1227 = vmatpush.bf16.msra.mxu0 %v874
    %1228 = vmatpush.bf16.msra.mxu0 %v871
    %1229 = vmatpush.bf16.msra.mxu0 %v868
    %1230 = vmatpush.bf16.msra.mxu0 %v865
    %1231 = vmatpush.bf16.msra.mxu0 %v862
    %1232 = vmatpush.bf16.msra.mxu0 %v859
    %1233 = vmatmul.bf16.gmra.mxu0 %v111
    %v1234 = vpop.f32.mrf.mxu0
    %v1235 = vadd.f32 %v1222, %v1234
    %v1236 = vpop.f32.mrf.mxu0
    %1237 = vdwg.mxu0
    %1238 = vmatpush.bf16.msra.mxu0 %v904
    %1239 = vmatpush.bf16.msra.mxu0 %v901
    %1240 = vmatpush.bf16.msra.mxu0 %v898
    %1241 = vmatpush.bf16.msra.mxu0 %v895
    %1242 = vmatpush.bf16.msra.mxu0 %v892
    %1243 = vmatpush.bf16.msra.mxu0 %v889
    %1244 = vmatpush.bf16.msra.mxu0 %v886
    %1245 = vmatpush.bf16.msra.mxu0 %v883
    %1246 = vmatmul.bf16.gmra.mxu0 %v112
    %v1247 = vpop.f32.mrf.mxu0
    %v1248 = vadd.f32 %v1235, %v1247
    %v1249 = vpop.f32.mrf.mxu0
    %1250 = vdwg.mxu0
    %1251 = vmatpush.bf16.msra.mxu0 %v928
    %1252 = vmatpush.bf16.msra.mxu0 %v925
    %1253 = vmatpush.bf16.msra.mxu0 %v922
    %1254 = vmatpush.bf16.msra.mxu0 %v919
    %1255 = vmatpush.bf16.msra.mxu0 %v916
    %1256 = vmatpush.bf16.msra.mxu0 %v913
    %1257 = vmatpush.bf16.msra.mxu0 %v910
    %1258 = vmatpush.bf16.msra.mxu0 %v907
    %1259 = vmatmul.bf16.gmra.mxu0 %v113
    %v1260 = vpop.f32.mrf.mxu0
    %v1261 = vadd.f32 %v1248, %v1260
    %v1262 = vpop.f32.mrf.mxu0
    %1263 = vdwg.mxu0
    %1264 = vmatpush.bf16.msra.mxu0 %v952
    %1265 = vmatpush.bf16.msra.mxu0 %v949
    %1266 = vmatpush.bf16.msra.mxu0 %v946
    %1267 = vmatpush.bf16.msra.mxu0 %v943
    %1268 = vmatpush.bf16.msra.mxu0 %v940
    %1269 = vmatpush.bf16.msra.mxu0 %v937
    %1270 = vmatpush.bf16.msra.mxu0 %v934
    %1271 = vmatpush.bf16.msra.mxu0 %v931
    %1272 = vmatmul.bf16.gmra.mxu0 %v114
    %v1273 = vpop.f32.mrf.mxu0
    %v1274 = vadd.f32 %v1261, %v1273
    %v1275 = vpop.f32.mrf.mxu0
    %1276 = vdwg.mxu0
    %1277 = vmatpush.bf16.msra.mxu0 0
    %1278 = vmatpush.bf16.msra.mxu0 0
    %1279 = vmatpush.bf16.msra.mxu0 0
    %1280 = vmatpush.bf16.msra.mxu0 0
    %1281 = vmatpush.bf16.msra.mxu0 0
    %1282 = vmatpush.bf16.msra.mxu0 0
    %1283 = vmatpush.bf16.msra.mxu0 0
    %1284 = vmatpush.bf16.msra.mxu0 %v955
    %1285 = vmatmul.bf16.gmra.mxu0 %v1106
    %v1286 = vpop.f32.mrf.mxu0
    %v1287 = vadd.f32 %v1274, %v1286
    %v1288 = vpop.f32.mrf.mxu0
    %1289 = vdwg.mxu0
    %1290 = vmatpush.bf16.msra.mxu0 %v833
    %1291 = vmatpush.bf16.msra.mxu0 %v830
    %1292 = vmatpush.bf16.msra.mxu0 %v827
    %1293 = vmatpush.bf16.msra.mxu0 %v824
    %1294 = vmatpush.bf16.msra.mxu0 %v821
    %1295 = vmatpush.bf16.msra.mxu0 %v818
    %1296 = vmatpush.bf16.msra.mxu0 %v815
    %1297 = vmatpush.bf16.msra.mxu0 %v812
    %1298 = vmatmul.bf16.gmra.mxu0 %v109
    %v1299 = vpop.f32.mrf.mxu0
    %v1300 = vadd.f32 %v316, %v1299
    %v1301 = vpop.f32.mrf.mxu0
    %1302 = vdwg.mxu0
    %1303 = vmatpush.bf16.msra.mxu0 %v857
    %1304 = vmatpush.bf16.msra.mxu0 %v854
    %1305 = vmatpush.bf16.msra.mxu0 %v851
    %1306 = vmatpush.bf16.msra.mxu0 %v848
    %1307 = vmatpush.bf16.msra.mxu0 %v845
    %1308 = vmatpush.bf16.msra.mxu0 %v842
    %1309 = vmatpush.bf16.msra.mxu0 %v839
    %1310 = vmatpush.bf16.msra.mxu0 %v836
    %1311 = vmatmul.bf16.gmra.mxu0 %v110
    %v1312 = vpop.f32.mrf.mxu0
    %v1313 = vadd.f32 %v1300, %v1312
    %v1314 = vpop.f32.mrf.mxu0
    %1315 = vdwg.mxu0
    %1316 = vmatpush.bf16.msra.mxu0 %v881
    %1317 = vmatpush.bf16.msra.mxu0 %v878
    %1318 = vmatpush.bf16.msra.mxu0 %v875
    %1319 = vmatpush.bf16.msra.mxu0 %v872
    %1320 = vmatpush.bf16.msra.mxu0 %v869
    %1321 = vmatpush.bf16.msra.mxu0 %v866
    %1322 = vmatpush.bf16.msra.mxu0 %v863
    %1323 = vmatpush.bf16.msra.mxu0 %v860
    %1324 = vmatmul.bf16.gmra.mxu0 %v111
    %v1325 = vpop.f32.mrf.mxu0
    %v1326 = vadd.f32 %v1313, %v1325
    %v1327 = vpop.f32.mrf.mxu0
    %1328 = vdwg.mxu0
    %1329 = vmatpush.bf16.msra.mxu0 %v905
    %1330 = vmatpush.bf16.msra.mxu0 %v902
    %1331 = vmatpush.bf16.msra.mxu0 %v899
    %1332 = vmatpush.bf16.msra.mxu0 %v896
    %1333 = vmatpush.bf16.msra.mxu0 %v893
    %1334 = vmatpush.bf16.msra.mxu0 %v890
    %1335 = vmatpush.bf16.msra.mxu0 %v887
    %1336 = vmatpush.bf16.msra.mxu0 %v884
    %1337 = vmatmul.bf16.gmra.mxu0 %v112
    %v1338 = vpop.f32.mrf.mxu0
    %v1339 = vadd.f32 %v1326, %v1338
    %v1340 = vpop.f32.mrf.mxu0
    %1341 = vdwg.mxu0
    %1342 = vmatpush.bf16.msra.mxu0 %v929
    %1343 = vmatpush.bf16.msra.mxu0 %v926
    %1344 = vmatpush.bf16.msra.mxu0 %v923
    %1345 = vmatpush.bf16.msra.mxu0 %v920
    %1346 = vmatpush.bf16.msra.mxu0 %v917
    %1347 = vmatpush.bf16.msra.mxu0 %v914
    %1348 = vmatpush.bf16.msra.mxu0 %v911
    %1349 = vmatpush.bf16.msra.mxu0 %v908
    %1350 = vmatmul.bf16.gmra.mxu0 %v113
    %v1351 = vpop.f32.mrf.mxu0
    %v1352 = vadd.f32 %v1339, %v1351
    %v1353 = vpop.f32.mrf.mxu0
    %1354 = vdwg.mxu0
    %1355 = vmatpush.bf16.msra.mxu0 %v953
    %1356 = vmatpush.bf16.msra.mxu0 %v950
    %1357 = vmatpush.bf16.msra.mxu0 %v947
    %1358 = vmatpush.bf16.msra.mxu0 %v944
    %1359 = vmatpush.bf16.msra.mxu0 %v941
    %1360 = vmatpush.bf16.msra.mxu0 %v938
    %1361 = vmatpush.bf16.msra.mxu0 %v935
    %1362 = vmatpush.bf16.msra.mxu0 %v932
    %1363 = vmatmul.bf16.gmra.mxu0 %v114
    %v1364 = vpop.f32.mrf.mxu0
    %v1365 = vadd.f32 %v1352, %v1364
    %v1366 = vpop.f32.mrf.mxu0
    %1367 = vdwg.mxu0
    %1368 = vmatpush.bf16.msra.mxu0 0
    %1369 = vmatpush.bf16.msra.mxu0 0
    %1370 = vmatpush.bf16.msra.mxu0 0
    %1371 = vmatpush.bf16.msra.mxu0 0
    %1372 = vmatpush.bf16.msra.mxu0 0
    %1373 = vmatpush.bf16.msra.mxu0 0
    %1374 = vmatpush.bf16.msra.mxu0 0
    %1375 = vmatpush.bf16.msra.mxu0 %v956
    %1376 = vmatmul.bf16.gmra.mxu0 %v1106
    %v1377 = vpop.f32.mrf.mxu0
    %v1378 = vadd.f32 %v1365, %v1377
    %v1379 = vpop.f32.mrf.mxu0
    %1380 = vdwg.mxu0
    %v1381 = vmax.f32 %v1196, 0.0
    %v1382 = vmax.f32 %v1287, 0.0
    %v1383 = vmax.f32 %v1378, 0.0
    %v1384 = vpack.c.bf16 %v1381, %v1381
    %v1385 = vpack.c.bf16 %v1382, %v1382
    %v1386 = vpack.c.bf16 %v1383, %v1383
    %v1387 = vld [vmem:[#allocation8] sm:$0xf]
    %v1388 = vld [vmem:[#allocation8 + $0x4] sm:$0xf]
    %v1389 = vld [vmem:[#allocation8 + $0x8] sm:$0xf]
    %v1390 = vld [vmem:[#allocation8 + $0xc] sm:$0xf]
    %v1391 = vld [vmem:[#allocation8 + $0x10] sm:$0xf]
    %v1392 = vld [vmem:[#allocation8 + $0x14] sm:$0xf]
    %v1393 = vld [vmem:[#allocation8 + $0x18] sm:$0xf]
    %v1394 = vld [vmem:[#allocation8 + $0x1c] sm:$0xf]
    %v1395 = vld [vmem:[#allocation8 + $0x20] sm:$0xf]
    %v1396 = vld [vmem:[#allocation8 + $0x24] sm:$0xf]
    %v1397 = vld [vmem:[#allocation8 + $0x28] sm:$0xf]
    %v1398 = vld [vmem:[#allocation8 + $0x2c] sm:$0xf]
    %v1399 = vld [vmem:[#allocation8 + $0x30] sm:$0xf]
    %v1400 = vld [vmem:[#allocation8 + $0x34] sm:$0xf]
    %v1401 = vld [vmem:[#allocation8 + $0x38] sm:$0xf]
    %v1402 = vld [vmem:[#allocation8 + $0x3c] sm:$0xf]
    %v1403 = vld [vmem:[#allocation8 + $0x40] sm:$0xf]
    %v1404 = vld [vmem:[#allocation8 + $0x44] sm:$0xf]
    %v1405 = vld [vmem:[#allocation8 + $0x48] sm:$0xf]
    %v1406 = vld [vmem:[#allocation8 + $0x4c] sm:$0xf]
    %v1407 = vld [vmem:[#allocation8 + $0x50] sm:$0xf]
    %v1408 = vld [vmem:[#allocation8 + $0x54] sm:$0xf]
    %v1409 = vld [vmem:[#allocation8 + $0x58] sm:$0xf]
    %v1410 = vld [vmem:[#allocation8 + $0x5c] sm:$0xf]
    %v1411 = vld [vmem:[#allocation8 + $0x60] sm:$0xf]
    %v1412 = vld [vmem:[#allocation8 + $0x64] sm:$0xf]
    %v1413 = vld [vmem:[#allocation8 + $0x68] sm:$0xf]
    %v1414 = vld [vmem:[#allocation8 + $0x6c] sm:$0xf]
    %v1415 = vld [vmem:[#allocation8 + $0x70] sm:$0xf]
    %v1416 = vld [vmem:[#allocation8 + $0x74] sm:$0xf]
    %v1417 = vld [vmem:[#allocation8 + $0x78] sm:$0xf]
    %v1418 = vld [vmem:[#allocation8 + $0x7c] sm:$0xf]
    %v1419 = vld [vmem:[#allocation8 + $0x80] sm:$0xf]
    %v1420 = vld [vmem:[#allocation8 + $0x84] sm:$0xf]
    %v1421 = vld [vmem:[#allocation8 + $0x88] sm:$0xf]
    %v1422 = vld [vmem:[#allocation8 + $0x8c] sm:$0xf]
    %v1423 = vld [vmem:[#allocation8 + $0x90] sm:$0xf]
    %v1424 = vld [vmem:[#allocation8 + $0x94] sm:$0xf]
    %v1425 = vld [vmem:[#allocation8 + $0x98] sm:$0xf]
    %v1426 = vld [vmem:[#allocation8 + $0x9c] sm:$0xf]
    %v1427 = vld [vmem:[#allocation8 + $0xa0] sm:$0xf]
    %v1428 = vld [vmem:[#allocation8 + $0xa4] sm:$0xf]
    %v1429 = vld [vmem:[#allocation8 + $0xa8] sm:$0xf]
    %v1430 = vld [vmem:[#allocation8 + $0xac] sm:$0xf]
    %v1431 = vld [vmem:[#allocation8 + $0xb0] sm:$0xf]
    %v1432 = vld [vmem:[#allocation8 + $0xb4] sm:$0xf]
    %v1433 = vld [vmem:[#allocation8 + $0xb8] sm:$0xf]
    %v1434 = vld [vmem:[#allocation8 + $0xbc] sm:$0xf]
    %v1435 = vld [vmem:[%s4] sm:$0x1]
    %v1437 = vperm.slane %v1435, 0
    %v1487 = vunpack.c.l.b16 %v1387
    %v1488 = vunpack.c.l.b16 %v1388
    %v1489 = vunpack.c.l.b16 %v1389
    %v1490 = vunpack.c.l.b16 %v1390
    %v1491 = vunpack.c.l.b16 %v1391
    %v1492 = vunpack.c.l.b16 %v1392
    %v1493 = vunpack.c.l.b16 %v1393
    %v1494 = vunpack.c.l.b16 %v1394
    %v1495 = vunpack.c.l.b16 %v1395
    %v1496 = vunpack.c.l.b16 %v1396
    %v1497 = vunpack.c.l.b16 %v1397
    %v1498 = vunpack.c.l.b16 %v1398
    %v1499 = vunpack.c.l.b16 %v1399
    %v1500 = vunpack.c.l.b16 %v1400
    %v1501 = vunpack.c.l.b16 %v1401
    %v1502 = vunpack.c.l.b16 %v1402
    %v1503 = vunpack.c.l.b16 %v1403
    %v1504 = vunpack.c.l.b16 %v1404
    %v1505 = vunpack.c.l.b16 %v1405
    %v1506 = vunpack.c.l.b16 %v1406
    %v1507 = vunpack.c.l.b16 %v1407
    %v1508 = vunpack.c.l.b16 %v1408
    %v1509 = vunpack.c.l.b16 %v1409
    %v1510 = vunpack.c.l.b16 %v1410
    %v1511 = vunpack.c.l.b16 %v1411
    %v1512 = vunpack.c.l.b16 %v1412
    %v1513 = vunpack.c.l.b16 %v1413
    %v1514 = vunpack.c.l.b16 %v1414
    %v1515 = vunpack.c.l.b16 %v1415
    %v1516 = vunpack.c.l.b16 %v1416
    %v1517 = vunpack.c.l.b16 %v1417
    %v1518 = vunpack.c.l.b16 %v1418
    %v1519 = vunpack.c.l.b16 %v1419
    %v1520 = vunpack.c.l.b16 %v1420
    %v1521 = vunpack.c.l.b16 %v1421
    %v1522 = vunpack.c.l.b16 %v1422
    %v1523 = vunpack.c.l.b16 %v1423
    %v1524 = vunpack.c.l.b16 %v1424
    %v1525 = vunpack.c.l.b16 %v1425
    %v1526 = vunpack.c.l.b16 %v1426
    %v1527 = vunpack.c.l.b16 %v1427
    %v1528 = vunpack.c.l.b16 %v1428
    %v1529 = vunpack.c.l.b16 %v1429
    %v1530 = vunpack.c.l.b16 %v1430
    %v1531 = vunpack.c.l.b16 %v1431
    %v1532 = vunpack.c.l.b16 %v1432
    %v1533 = vunpack.c.l.b16 %v1433
    %v1534 = vunpack.c.l.b16 %v1434
    %v1535 = vpack.c.b16 %v1488, %v1487
    %v1536 = vpack.c.b16 %v1490, %v1489
    %v1537 = vpack.c.b16 %v1492, %v1491
    %v1538 = vpack.c.b16 %v1494, %v1493
    %v1539 = vpack.c.b16 %v1496, %v1495
    %v1540 = vpack.c.b16 %v1498, %v1497
    %v1541 = vpack.c.b16 %v1500, %v1499
    %v1542 = vpack.c.b16 %v1502, %v1501
    %v1543 = vpack.c.b16 %v1504, %v1503
    %v1544 = vpack.c.b16 %v1506, %v1505
    %v1545 = vpack.c.b16 %v1508, %v1507
    %v1546 = vpack.c.b16 %v1510, %v1509
    %v1547 = vpack.c.b16 %v1512, %v1511
    %v1548 = vpack.c.b16 %v1514, %v1513
    %v1549 = vpack.c.b16 %v1516, %v1515
    %v1550 = vpack.c.b16 %v1518, %v1517
    %v1551 = vpack.c.b16 %v1520, %v1519
    %v1552 = vpack.c.b16 %v1522, %v1521
    %v1553 = vpack.c.b16 %v1524, %v1523
    %v1554 = vpack.c.b16 %v1526, %v1525
    %v1555 = vpack.c.b16 %v1528, %v1527
    %v1556 = vpack.c.b16 %v1530, %v1529
    %v1557 = vpack.c.b16 %v1532, %v1531
    %v1558 = vpack.c.b16 %v1534, %v1533
    %1583 = vmatpush.bf16.msra.mxu0 %v1542
    %1584 = vmatpush.bf16.msra.mxu0 %v1541
    %1585 = vmatpush.bf16.msra.mxu0 %v1540
    %1586 = vmatpush.bf16.msra.mxu0 %v1539
    %1587 = vmatpush.bf16.msra.mxu0 %v1538
    %1588 = vmatpush.bf16.msra.mxu0 %v1537
    %1589 = vmatpush.bf16.msra.mxu0 %v1536
    %1590 = vmatpush.bf16.msra.mxu0 %v1535
    %1591 = vmatmul.bf16.gmra.mxu0 %v1384
    %v1592 = vpop.f32.mrf.mxu0
    %v1593 = vadd.f32 %v1437, %v1592
    %v1594 = vpop.f32.mrf.mxu0
    %1595 = vdwg.mxu0
    %1596 = vmatpush.bf16.msra.mxu0 %v1550
    %1597 = vmatpush.bf16.msra.mxu0 %v1549
    %1598 = vmatpush.bf16.msra.mxu0 %v1548
    %1599 = vmatpush.bf16.msra.mxu0 %v1547
    %1600 = vmatpush.bf16.msra.mxu0 %v1546
    %1601 = vmatpush.bf16.msra.mxu0 %v1545
    %1602 = vmatpush.bf16.msra.mxu0 %v1544
    %1603 = vmatpush.bf16.msra.mxu0 %v1543
    %1604 = vmatmul.bf16.gmra.mxu0 %v1385
    %v1605 = vpop.f32.mrf.mxu0
    %v1606 = vadd.f32 %v1593, %v1605
    %v1607 = vpop.f32.mrf.mxu0
    %1608 = vdwg.mxu0
    %1609 = vmatpush.bf16.msra.mxu0 %v1558
    %1610 = vmatpush.bf16.msra.mxu0 %v1557
    %1611 = vmatpush.bf16.msra.mxu0 %v1556
    %1612 = vmatpush.bf16.msra.mxu0 %v1555
    %1613 = vmatpush.bf16.msra.mxu0 %v1554
    %1614 = vmatpush.bf16.msra.mxu0 %v1553
    %1615 = vmatpush.bf16.msra.mxu0 %v1552
    %1616 = vmatpush.bf16.msra.mxu0 %v1551
    %1617 = vmatmul.bf16.gmra.mxu0 %v1386
    %v1618 = vpop.f32.mrf.mxu0
    %v1619 = vadd.f32 %v1606, %v1618
    %v1620 = vpop.f32.mrf.mxu0
    %1621 = vdwg.mxu0
    %v1622 = vmax.f32 %v1619, 0.0
    %v1623 = vpack.c.bf16 %v1622, %v1622
    %v1624 = vld [vmem:[#allocation10] sm:$0xf]
    %v1625 = vld [vmem:[#allocation10 + $0x4] sm:$0xf]
    %v1626 = vld [vmem:[#allocation10 + $0x8] sm:$0xf]
    %v1627 = vld [vmem:[#allocation10 + $0xc] sm:$0xf]
    %v1628 = vld [vmem:[#allocation10 + $0x10] sm:$0xf]
    %v1629 = vld [vmem:[#allocation10 + $0x14] sm:$0xf]
    %v1630 = vld [vmem:[#allocation10 + $0x18] sm:$0xf]
    %v1631 = vld [vmem:[#allocation10 + $0x1c] sm:$0xf]
    %v1632 = vld [vmem:[#allocation10 + $0x20] sm:$0xf]
    %v1633 = vld [vmem:[#allocation10 + $0x24] sm:$0xf]
    %v1634 = vld [vmem:[#allocation10 + $0x28] sm:$0xf]
    %v1635 = vld [vmem:[#allocation10 + $0x2c] sm:$0xf]
    %v1636 = vld [vmem:[#allocation10 + $0x30] sm:$0xf]
    %v1637 = vld [vmem:[#allocation10 + $0x34] sm:$0xf]
    %v1638 = vld [vmem:[#allocation10 + $0x38] sm:$0xf]
    %v1639 = vld [vmem:[#allocation10 + $0x3c] sm:$0xf]
    %v1640 = vld [vmem:[%s6] sm:$0x1]
    %v1642 = vperm.slane %v1640, 0
    %v1660 = vunpack.c.l.b16 %v1624
    %v1661 = vunpack.c.l.b16 %v1625
    %v1662 = vunpack.c.l.b16 %v1626
    %v1663 = vunpack.c.l.b16 %v1627
    %v1664 = vunpack.c.l.b16 %v1628
    %v1665 = vunpack.c.l.b16 %v1629
    %v1666 = vunpack.c.l.b16 %v1630
    %v1667 = vunpack.c.l.b16 %v1631
    %v1668 = vunpack.c.l.b16 %v1632
    %v1669 = vunpack.c.l.b16 %v1633
    %v1670 = vunpack.c.l.b16 %v1634
    %v1671 = vunpack.c.l.b16 %v1635
    %v1672 = vunpack.c.l.b16 %v1636
    %v1673 = vunpack.c.l.b16 %v1637
    %v1674 = vunpack.c.l.b16 %v1638
    %v1675 = vunpack.c.l.b16 %v1639
    %v1676 = vpack.c.b16 %v1661, %v1660
    %v1677 = vpack.c.b16 %v1663, %v1662
    %v1678 = vpack.c.b16 %v1665, %v1664
    %v1679 = vpack.c.b16 %v1667, %v1666
    %v1680 = vpack.c.b16 %v1669, %v1668
    %v1681 = vpack.c.b16 %v1671, %v1670
    %v1682 = vpack.c.b16 %v1673, %v1672
    %v1683 = vpack.c.b16 %v1675, %v1674
    %1692 = vmatpush.bf16.msra.mxu0 %v1683
    %1693 = vmatpush.bf16.msra.mxu0 %v1682
    %1694 = vmatpush.bf16.msra.mxu0 %v1681
    %1695 = vmatpush.bf16.msra.mxu0 %v1680
    %1696 = vmatpush.bf16.msra.mxu0 %v1679
    %1697 = vmatpush.bf16.msra.mxu0 %v1678
    %1698 = vmatpush.bf16.msra.mxu0 %v1677
    %1699 = vmatpush.bf16.msra.mxu0 %v1676
    %1700 = vmatmul.bf16.gmra.mxu0 %v1623
    %v1701 = vpop.f32.mrf.mxu0
    %v1702 = vadd.f32 %v1642, %v1701
    %v1703 = vpop.f32.mrf.mxu0
    %1704 = vdwg.mxu0
    %1705 = vmax.xlane.f32.xlu0 %v1702
    %v1706 = vpop.xlane.xlu0 %1705
    %v1707 = vsub.f32 %v1702, %v1706
    %v1708 = vmul.f32 %v1707, 1.442695
    %v1709 = vpow.pop %v1708
    %1710 = vadd.xlane.f32.xlu0 %v1709
    %v1711 = vpop.xlane.xlu0 %1710
    %v1712 = vlog2.pop %v1711
    %v1713 = vmul.f32 %v1712, 0.6931472
    %v1714 = vsub.f32 %v1707, %v1713
    %1715 = vst [vmem:[#allocation11] sm:$0xff] %v1714
    // Predicated region
    $region50: #{tpu_custom_call.1} parent=1 // pred_check
      _
    $region51: #{tpu_custom_call.1} parent=1 // pred_check_branch
      %1717 = sbr.rel (0) target = $region53
    $region52: #{tpu_custom_call.1} parent=1 // pred_region
      %1719 = vsyncadd [#allocation4], 0
      %s1721 = sshll.u32 [#allocation11], 4
      %s1722 = int_to_ptr.vmem [resolvable:$true] %s1721
      %s1723 = sshll.u32 %s7, 4
      %s1724 = int_to_ptr.hbm [resolvable:$true] %s1723
      %1726 = dma.vmem_to_hbm [thread:$0]  %s1722, 128, %s1724, [#allocation4]
    $region53: #{tpu_custom_call.1} parent=1 // pred_fallthru
      _
    // Predicated region
    $region54: #{tpu_custom_call.1} parent=1 // pred_check
      _
    $region55: #{tpu_custom_call.1} parent=1 // pred_check_branch
      %1728 = sbr.rel (0) target = $region57
    $region56: #{tpu_custom_call.1} parent=1 // pred_region
      %1730 = dma.done [#allocation4], 128
    $region57: #{tpu_custom_call.1} parent=1 // pred_fallthru
      _
    %1731 = vsyncpa [#allocation3], 1
    %1732 = vsyncpa [#allocation6], 1
    %1733 = vsyncpa [#allocation9], 1
    %1734 = vsyncpa [#allocation4], 1

</llo_original>
